<compile_context>
chip_gen: v6e
topology: v6e:2x2x1
jax: 0.10.0
libtpu: 0.0.40
codegen_flags: <defaults>
</compile_context>

<pallas_src>
import functools

import jax
import jax.numpy as jnp
from jax.experimental import pallas as pl
from jax.experimental.pallas import tpu as pltpu

_COMPUTE_DTYPE = jnp.bfloat16   # MXU-native operand dtype (f32 accumulation)


def _cdiv(a, b):
    return -(-a // b)


def _round_up(x, m):
    return _cdiv(x, m) * m


def _pad2(a, rows, cols, dtype=None):
    if dtype is not None and a.dtype != dtype:
        a = a.astype(dtype)
    r, c = a.shape
    if r == rows and c == cols:
        return a
    return jnp.pad(a, ((0, rows - r), (0, cols - c)))


def _softplus(x):
    # Numerically stable softplus == jax.nn.softplus == torch.F.softplus.
    return jnp.maximum(x, 0.0) + jnp.log1p(jnp.exp(-jnp.abs(x)))


def _vmem_capacity_bytes():
    try:
        return int(pltpu.get_tpu_info().vmem_capacity_bytes)
    except Exception:
        return 64 << 20   # conservative (v7x per-TC VMEM)


# ----------------------------- kernel --------------------------------------- #

def _decoder_kernel(z_ref, w1_ref, b1_ref, w_ref, b_ref, out_ref, h_ref,
                    *, n_sp_tiles, n_tiles):
    # Grid = (batch_tile i [parallel], out_tile j [arbitrary, innermost]).
    # The hidden-activation cache below REQUIRES j to stay the innermost,
    # sequential ("arbitrary") axis: it is recomputed exactly when j == 0.
    j = pl.program_id(1)

    @pl.when(j == 0)
    def _():
        h = jnp.dot(z_ref[...], w1_ref[...], preferred_element_type=jnp.float32)
        h = jnp.maximum(h + b1_ref[...], 0.0)
        h_ref[...] = h.astype(h_ref.dtype)          # cache hidden as bf16

    y = jnp.dot(h_ref[...], w_ref[...], preferred_element_type=jnp.float32)
    y = y + b_ref[...]

    if n_sp_tiles == n_tiles:            # 'nb': softplus on every tile
        out_ref[...] = _softplus(y).astype(out_ref.dtype)
    elif n_sp_tiles == 0:                # 'gauss': identity epilogue
        out_ref[...] = y.astype(out_ref.dtype)
    else:                                # 'zinb': softplus on the mu half only
        @pl.when(j < n_sp_tiles)
        def _():
            out_ref[...] = _softplus(y).astype(out_ref.dtype)

        @pl.when(j >= n_sp_tiles)
        def _():
            out_ref[...] = y.astype(out_ref.dtype)


# --------------------- one-time parameter preparation ----------------------- #

def prepare_decoder_params(params, recon_type="nb", *, n_tile=None):
    """Pads, casts to bf16 and (for zinb) fuses W2|W3 ONCE, and derives tile
    sizes from the chip's VMEM capacity. Returns a dict consumed by
    decoder_forward()."""
    if recon_type not in ("nb", "gauss", "zinb"):
        raise ValueError(f"unknown recon_type: {recon_type}")

    z_dim, hidden = params["w1"].shape
    out_dim = params["w2"].shape[1]

    vmem = _vmem_capacity_bytes()
    big_vmem = vmem >= (100 << 20)                 # v5e / v6e: 128 MiB
    tb_cap = 512 if big_vmem else 256              # batch-tile cap
    desired_tn = n_tile if n_tile is not None else (1024 if big_vmem else 512)
    budget = max(vmem // 2 - (8 << 20), 16 << 20)  # double-buffered footprint

    k_pad = _round_up(z_dim, 128)
    h_pad = _round_up(hidden, 128)
    d_lane = _round_up(out_dim, 128)

    def footprint(tn, tb):                         # bytes, worst case (2 bufs)
        return (2 * tb * k_pad * 2                 # z tile (bf16)
                + 2 * k_pad * h_pad * 2            # W1 (assume 2 bufs)
                + 2 * h_pad * 4                    # b1
                + 2 * h_pad * tn * 2               # W2|W3 tile (bf16)
                + 2 * tn * 4                       # b2|b3 tile
                + 2 * tb * tn * 4                  # output tile (f32)
                + tb * h_pad * 2)                  # hidden scratch (bf16)

    tn = min(_round_up(desired_tn, 128), d_lane)
    while tn > 128 and footprint(tn, tb_cap) > budget:
        tn -= 128
    while tb_cap > 16 and footprint(tn, tb_cap) > budget:
        tb_cap //= 2

    d_pad = _round_up(out_dim, tn)

    w1 = _pad2(params["w1"], k_pad, h_pad, _COMPUTE_DTYPE)
    b1 = _pad2(params["b1"], 1, h_pad, jnp.float32)
    w2 = _pad2(params["w2"], h_pad, d_pad, _COMPUTE_DTYPE)
    b2 = _pad2(params["b2"], 1, d_pad, jnp.float32)

    if recon_type == "zinb":
        w3 = _pad2(params["w3"], h_pad, d_pad, _COMPUTE_DTYPE)
        b3 = _pad2(params["b3"], 1, d_pad, jnp.float32)
        w = jnp.concatenate([w2, w3], axis=1)      # fused second-layer weight
        b = jnp.concatenate([b2, b3], axis=1)
        dw = 2 * d_pad
        n_sp_tiles = d_pad // tn                   # softplus on the mu half
    else:
        w, b, dw = w2, b2, d_pad
        n_sp_tiles = (d_pad // tn) if recon_type == "nb" else 0

    meta = dict(recon_type=recon_type, z_dim=z_dim, hidden=hidden,
                out_dim=out_dim, k_pad=k_pad, h_pad=h_pad, d_pad=d_pad,
                dw=dw, tn=tn, tb_cap=tb_cap, n_tiles=dw // tn,
                n_sp_tiles=n_sp_tiles,
                vmem_limit=max(min(vmem * 3 // 4, 100 << 20), 32 << 20))
    return {"w1": jax.block_until_ready(w1), "b1": b1, "w": w, "b": b,
            "meta": meta}


# ----------------------------- forward -------------------------------------- #

def decoder_forward(prep, z, *, batch_tile=None):
    """Decoder forward pass via a single fused Pallas kernel.
    `prep` comes from prepare_decoder_params()."""
    m = prep["meta"]
    B, z_dim = z.shape
    assert z_dim == m["z_dim"], "z_dim mismatch with prepared params"

    # Batch tile: pick from the number of tiles (bounds padding waste to < tb),
    # and force >=2 tiles for moderate B so both v7x TensorCores get work.
    if batch_tile is None:
        n_bt = _cdiv(B, m["tb_cap"])
        if n_bt < 2 and B >= 32:
            n_bt = 2
        tb = _round_up(_cdiv(B, n_bt), 16)
    else:
        tb = _round_up(batch_tile, 16)
    b_pad = _round_up(B, tb)

    z_p = _pad2(z, b_pad, m["k_pad"], _COMPUTE_DTYPE)

    grid = (b_pad // tb, m["n_tiles"])
    kernel = functools.partial(_decoder_kernel,
                               n_sp_tiles=m["n_sp_tiles"], n_tiles=m["n_tiles"])

    out_itemsize = jnp.dtype(z.dtype).itemsize
    cost = pl.CostEstimate(
        flops=int(2 * b_pad * (m["k_pad"] * m["h_pad"] + m["h_pad"] * m["dw"])),
        transcendentals=int(2 * b_pad * m["n_sp_tiles"] * m["tn"]),
        bytes_accessed=int(z_p.size * 2 + prep["w1"].size * 2
                           + prep["b1"].size * 4 + prep["w"].size * 2
                           + prep["b"].size * 4 + b_pad * m["dw"] * out_itemsize),
    )

    def run(single_buffer_consts, with_cost):
        const_kw = ({"pipeline_mode": pl.Buffered(1)}
                    if single_buffer_consts else {})
        in_specs = [
            pl.BlockSpec((tb, m["k_pad"]), lambda i, j: (i, 0)),            # z
            pl.BlockSpec((m["k_pad"], m["h_pad"]), lambda i, j: (0, 0),     # W1
                         **const_kw),
            pl.BlockSpec((1, m["h_pad"]), lambda i, j: (0, 0), **const_kw),  # b1
            pl.BlockSpec((m["h_pad"], m["tn"]), lambda i, j: (0, j)),        # W2|W3
            pl.BlockSpec((1, m["tn"]), lambda i, j: (0, j)),                 # b2|b3
        ]
        extra = {"cost_estimate": cost} if with_cost else {}
        out = pl.pallas_call(
            kernel,
            out_shape=jax.ShapeDtypeStruct((b_pad, m["dw"]), z.dtype),
            grid=grid,
            in_specs=in_specs,
            out_specs=pl.BlockSpec((tb, m["tn"]), lambda i, j: (i, j)),
            scratch_shapes=[pltpu.VMEM((tb, m["h_pad"]), _COMPUTE_DTYPE)],
            compiler_params=pltpu.CompilerParams(
                dimension_semantics=("parallel", "arbitrary"),
                vmem_limit_bytes=m["vmem_limit"]),
            **extra,
        )(z_p, prep["w1"], prep["b1"], prep["w"], prep["b"])
        return jax.block_until_ready(out)

    out = None
    last_err = None
    for sb, wc in ((True, True), (False, True), (False, False)):
        try:
            out = run(sb, wc)
            break
        except Exception as e:       # e.g. Buffered(1) unsupported -> fallback
            last_err = e
    if out is None:
        raise last_err

    if m["recon_type"] == "zinb":
        return (out[:B, :m["out_dim"]],
                out[:B, m["d_pad"]:m["d_pad"] + m["out_dim"]])
    return out[:B, :m["out_dim"]]


# ------------------------- parameter init ----------------------------------- #

def init_decoder_params(key, z_dim, hidden_size, out_dim, recon_type="nb",
                        dtype=jnp.float32):
    """nn.Linear default init: U(-1/sqrt(fan_in), 1/sqrt(fan_in)).
    Weights stored pre-transposed to (in, out)."""
    ks = jax.random.split(key, 6)

    def linear(kw, kb, fan_in, fan_out):
        bound = 1.0 / jnp.sqrt(fan_in)
        w = jax.random.uniform(kw, (fan_in, fan_out), dtype, -bound, bound)
        b = jax.random.uniform(kb, (1, fan_out), dtype, -bound, bound)
        return w, b

    w1, b1 = linear(ks[0], ks[1], z_dim, hidden_size)
    w2, b2 = linear(ks[2], ks[3], hidden_size, out_dim)
    params = {"w1": w1, "b1": b1, "w2": w2, "b2": b2}
    if recon_type == "zinb":
        w3, b3 = linear(ks[4], ks[5], hidden_size, out_dim)
        params["w3"] = w3
        params["b3"] = b3
    return params


# ------------------------- pure-JAX reference -------------------------------- #

def decoder_ref(params, z, recon_type="nb", compute_dtype=_COMPUTE_DTYPE):
    """Reference using the same bf16-operand / f32-accumulate math as the kernel."""
    zc = z.astype(compute_dtype)
    w1 = params["w1"].astype(compute_dtype)
    h = jnp.maximum(
        jnp.dot(zc, w1, preferred_element_type=jnp.float32) + params["b1"], 0.0)
    hc = h.astype(compute_dtype)

    def head(wk, bk):
        return (jnp.dot(hc, params[wk].astype(compute_dtype),
                        preferred_element_type=jnp.float32) + params[bk])

    y = head("w2", "b2")
    if recon_type == "zinb":
        return jax.nn.softplus(y), head("w3", "b3")
    if recon_type == "nb":
        return jax.nn.softplus(y)
    return y  # gauss


if __name__ == "__main__":
    key = jax.random.PRNGKey(0)
    kz, kp = jax.random.split(key)
    ok = True
    ATOL, RTOL = 1e-4, 1e-3

    # Small shapes matching the module's intent.
    B, z_dim, hidden_size, out_dim = 8, 16, 32, 64
    z = jax.random.normal(kz, (B, z_dim), jnp.float32)
    for recon_type in ("nb", "gauss", "zinb"):
        params = init_decoder_params(kp, z_dim, hidden_size, out_dim, recon_type)
        prep = prepare_decoder_params(params, recon_type)
        out = decoder_forward(prep, z)
        ref = decoder_ref(params, z, recon_type)
        if recon_type == "zinb":
            ok &= bool(jnp.allclose(out[0], ref[0], atol=ATOL, rtol=RTOL))
            ok &= bool(jnp.allclose(out[1], ref[1], atol=ATOL, rtol=RTOL))
        else:
            ok &= bool(jnp.allclose(out, ref, atol=ATOL, rtol=RTOL))

    # Exercise >=2 batch tiles + non-128-aligned out_dim padding.
    B2, out_dim2 = 40, 200
    z2 = jax.random.normal(kz, (B2, z_dim), jnp.float32)
    params2 = init_decoder_params(kp, z_dim, hidden_size, out_dim2, "nb")
    prep2 = prepare_decoder_params(params2, "nb", n_tile=128)
    ref2 = decoder_ref(params2, z2, "nb")
    out2 = decoder_forward(prep2, z2)                      # auto tiling
    ok &= bool(jnp.allclose(out2, ref2, atol=ATOL, rtol=RTOL))
    out3 = decoder_forward(prep2, z2, batch_tile=16)       # explicit tiny tile
    ok &= bool(jnp.allclose(out3, ref2, atol=ATOL, rtol=RTOL))

    print("KERNEL_OK" if ok else "MISMATCH")
</pallas_src>

<mosaic_0001>
module attributes {stable_mosaic.version = 11 : i64} {
  func.func @_decoder_kernel(%arg0: i32, %arg1: i32, %arg2: memref<16x128xbf16, #tpu.memory_space<vmem>>, %arg3: memref<128x128xbf16, #tpu.memory_space<vmem>>, %arg4: memref<1x128xf32, #tpu.memory_space<vmem>>, %arg5: memref<128x128xbf16, #tpu.memory_space<vmem>>, %arg6: memref<1x128xf32, #tpu.memory_space<vmem>>, %arg7: memref<16x128xf32, #tpu.memory_space<vmem>>, %arg8: memref<16x128xbf16, #tpu.memory_space<vmem>>) attributes {dimension_semantics = [#tpu.dimension_semantics<parallel>, #tpu.dimension_semantics<arbitrary>], iteration_bounds = array<i64: 1, 1>, scalar_prefetch = 0 : i64, scratch_operands = 1 : i64, tpu.core_type = #tpu.core_type<tc>, window_params = [{transform_indices = @transform_0, window_bounds = array<i64: 16, 128>}, {pipeline_mode = #tpu.pipeline_mode<synchronous>, transform_indices = @transform_1, window_bounds = array<i64: 128, 128>}, {pipeline_mode = #tpu.pipeline_mode<synchronous>, transform_indices = @transform_2, window_bounds = array<i64: 1, 128>}, {transform_indices = @transform_3, window_bounds = array<i64: 128, 128>}, {transform_indices = @transform_4, window_bounds = array<i64: 1, 128>}, {transform_indices = @transform_5, window_bounds = array<i64: 16, 128>}]} {
    %c0_i32 = arith.constant 0 : i32
    %0 = arith.cmpi eq, %arg1, %c0_i32 : i32
    %1 = arith.extui %0 : i1 to i32
    %c0_i32_0 = arith.constant 0 : i32
    %2 = arith.cmpi ne, %1, %c0_i32_0 : i32
    scf.if %2 {
      %c0_10 = arith.constant 0 : index
      %c0_11 = arith.constant 0 : index
      %18 = vector.load %arg2[%c0_10, %c0_11] : memref<16x128xbf16, #tpu.memory_space<vmem>>, vector<16x128xbf16>
      %c0_12 = arith.constant 0 : index
      %c0_13 = arith.constant 0 : index
      %19 = vector.load %arg3[%c0_12, %c0_13] : memref<128x128xbf16, #tpu.memory_space<vmem>>, vector<128x128xbf16>
      %cst_14 = arith.constant dense<0.000000e+00> : vector<16x128xf32>
      %20 = tpu.matmul %18, %19, %cst_14 {dimension_numbers = #tpu.dot_dimension_numbers<[1], [0], [0], [1], [0, 0, 1, 1], [], []>} : vector<16x128xbf16>, vector<128x128xbf16>, vector<16x128xf32> -> vector<16x128xf32>
      %c0_15 = arith.constant 0 : index
      %c0_16 = arith.constant 0 : index
      %21 = vector.load %arg4[%c0_15, %c0_16] : memref<1x128xf32, #tpu.memory_space<vmem>>, vector<1x128xf32>
      %22 = vector.broadcast %21 : vector<1x128xf32> to vector<16x128xf32>
      %23 = arith.addf %20, %22 : vector<16x128xf32>
      %cst_17 = arith.constant 0.000000e+00 : f32
      %24 = vector.broadcast %cst_17 : f32 to vector<16x128xf32>
      %25 = arith.maximumf %23, %24 : vector<16x128xf32>
      %26 = arith.truncf %25 : vector<16x128xf32> to vector<16x128xbf16>
      %c0_18 = arith.constant 0 : index
      %c0_19 = arith.constant 0 : index
      %27 = vector.load %arg8[%c0_18, %c0_19] : memref<16x128xbf16, #tpu.memory_space<vmem>>, vector<16x128xbf16>
      tpu.vector_store %arg8[%c0_18, %c0_19], %26 {strides = array<i32>} : memref<16x128xbf16, #tpu.memory_space<vmem>>, vector<16x128xbf16>,
    } else {
    }
    %c0 = arith.constant 0 : index
    %c0_1 = arith.constant 0 : index
    %3 = vector.load %arg8[%c0, %c0_1] : memref<16x128xbf16, #tpu.memory_space<vmem>>, vector<16x128xbf16>
    %c0_2 = arith.constant 0 : index
    %c0_3 = arith.constant 0 : index
    %4 = vector.load %arg5[%c0_2, %c0_3] : memref<128x128xbf16, #tpu.memory_space<vmem>>, vector<128x128xbf16>
    %cst = arith.constant dense<0.000000e+00> : vector<16x128xf32>
    %5 = tpu.matmul %3, %4, %cst {dimension_numbers = #tpu.dot_dimension_numbers<[1], [0], [0], [1], [0, 0, 1, 1], [], []>} : vector<16x128xbf16>, vector<128x128xbf16>, vector<16x128xf32> -> vector<16x128xf32>
    %c0_4 = arith.constant 0 : index
    %c0_5 = arith.constant 0 : index
    %6 = vector.load %arg6[%c0_4, %c0_5] : memref<1x128xf32, #tpu.memory_space<vmem>>, vector<1x128xf32>
    %7 = vector.broadcast %6 : vector<1x128xf32> to vector<16x128xf32>
    %8 = arith.addf %5, %7 : vector<16x128xf32>
    %cst_6 = arith.constant 0.000000e+00 : f32
    %9 = vector.broadcast %cst_6 : f32 to vector<16x128xf32>
    %10 = arith.maximumf %8, %9 : vector<16x128xf32>
    %11 = math.absf %8 : vector<16x128xf32>
    %cst_7 = arith.constant 0.000000e+00 : f32
    %12 = vector.broadcast %cst_7 : f32 to vector<16x128xf32>
    %13 = arith.subf %12, %11 : vector<16x128xf32>
    %14 = math.exp %13 : vector<16x128xf32>
    %15 = math.log1p %14 : vector<16x128xf32>
    %16 = arith.addf %10, %15 : vector<16x128xf32>
    %c0_8 = arith.constant 0 : index
    %c0_9 = arith.constant 0 : index
    %17 = vector.load %arg7[%c0_8, %c0_9] : memref<16x128xf32, #tpu.memory_space<vmem>>, vector<16x128xf32>
    tpu.vector_store %arg7[%c0_8, %c0_9], %16 {strides = array<i32>} : memref<16x128xf32, #tpu.memory_space<vmem>>, vector<16x128xf32>,
    return
  }
  func.func @transform_0(%arg0: i32, %arg1: i32) -> (i32, i32) {
    %c0_i32 = arith.constant 0 : i32
    %c0_i32_0 = arith.constant 0 : i32
    return %arg0, %c0_i32 : i32, i32
  }
  func.func @transform_1(%arg0: i32, %arg1: i32) -> (i32, i32) {
    %c0_i32 = arith.constant 0 : i32
    %c0_i32_0 = arith.constant 0 : i32
    %c0_i32_1 = arith.constant 0 : i32
    return %c0_i32, %c0_i32_0 : i32, i32
  }
  func.func @transform_2(%arg0: i32, %arg1: i32) -> (i32, i32) {
    %c0_i32 = arith.constant 0 : i32
    %c0_i32_0 = arith.constant 0 : i32
    %c0_i32_1 = arith.constant 0 : i32
    return %c0_i32, %c0_i32_0 : i32, i32
  }
  func.func @transform_3(%arg0: i32, %arg1: i32) -> (i32, i32) {
    %c0_i32 = arith.constant 0 : i32
    %c0_i32_0 = arith.constant 0 : i32
    return %c0_i32, %arg1 : i32, i32
  }
  func.func @transform_4(%arg0: i32, %arg1: i32) -> (i32, i32) {
    %c0_i32 = arith.constant 0 : i32
    %c0_i32_0 = arith.constant 0 : i32
    return %c0_i32, %arg1 : i32, i32
  }
  func.func @transform_5(%arg0: i32, %arg1: i32) -> (i32, i32) {
    %c0_i32 = arith.constant 0 : i32
    return %arg0, %arg1 : i32, i32
  }
}

module attributes {stable_mosaic.version = 11 : i64} {
  func.func @_decoder_kernel(%arg0: i32, %arg1: i32, %arg2: memref<16x128xbf16, #tpu.memory_space<vmem>>, %arg3: memref<128x128xbf16, #tpu.memory_space<vmem>>, %arg4: memref<1x128xf32, #tpu.memory_space<vmem>>, %arg5: memref<128x128xbf16, #tpu.memory_space<vmem>>, %arg6: memref<1x128xf32, #tpu.memory_space<vmem>>, %arg7: memref<16x128xf32, #tpu.memory_space<vmem>>, %arg8: memref<16x128xbf16, #tpu.memory_space<vmem>>) attributes {dimension_semantics = [#tpu.dimension_semantics<parallel>, #tpu.dimension_semantics<arbitrary>], iteration_bounds = array<i64: 1, 1>, scalar_prefetch = 0 : i64, scratch_operands = 1 : i64, tpu.core_type = #tpu.core_type<tc>, window_params = [{transform_indices = @transform_0, window_bounds = array<i64: 16, 128>}, {pipeline_mode = #tpu.pipeline_mode<synchronous>, transform_indices = @transform_1, window_bounds = array<i64: 128, 128>}, {pipeline_mode = #tpu.pipeline_mode<synchronous>, transform_indices = @transform_2, window_bounds = array<i64: 1, 128>}, {transform_indices = @transform_3, window_bounds = array<i64: 128, 128>}, {transform_indices = @transform_4, window_bounds = array<i64: 1, 128>}, {transform_indices = @transform_5, window_bounds = array<i64: 16, 128>}]} {
    %c0_i32 = arith.constant 0 : i32
    %0 = arith.cmpi eq, %arg1, %c0_i32 : i32
    %1 = arith.extui %0 : i1 to i32
    %c0_i32_0 = arith.constant 0 : i32
    %2 = arith.cmpi ne, %1, %c0_i32_0 : i32
    scf.if %2 {
      %c0_10 = arith.constant 0 : index
      %c0_11 = arith.constant 0 : index
      %18 = vector.load %arg2[%c0_10, %c0_11] : memref<16x128xbf16, #tpu.memory_space<vmem>>, vector<16x128xbf16>
      %c0_12 = arith.constant 0 : index
      %c0_13 = arith.constant 0 : index
      %19 = vector.load %arg3[%c0_12, %c0_13] : memref<128x128xbf16, #tpu.memory_space<vmem>>, vector<128x128xbf16>
      %cst_14 = arith.constant dense<0.000000e+00> : vector<16x128xf32>
      %20 = tpu.matmul %18, %19, %cst_14 {dimension_numbers = #tpu.dot_dimension_numbers<[1], [0], [0], [1], [0, 0, 1, 1], [], []>} : vector<16x128xbf16>, vector<128x128xbf16>, vector<16x128xf32> -> vector<16x128xf32>
      %c0_15 = arith.constant 0 : index
      %c0_16 = arith.constant 0 : index
      %21 = vector.load %arg4[%c0_15, %c0_16] : memref<1x128xf32, #tpu.memory_space<vmem>>, vector<1x128xf32>
      %22 = vector.broadcast %21 : vector<1x128xf32> to vector<16x128xf32>
      %23 = arith.addf %20, %22 : vector<16x128xf32>
      %cst_17 = arith.constant 0.000000e+00 : f32
      %24 = vector.broadcast %cst_17 : f32 to vector<16x128xf32>
      %25 = arith.maximumf %23, %24 : vector<16x128xf32>
      %26 = arith.truncf %25 : vector<16x128xf32> to vector<16x128xbf16>
      %c0_18 = arith.constant 0 : index
      %c0_19 = arith.constant 0 : index
      %27 = vector.load %arg8[%c0_18, %c0_19] : memref<16x128xbf16, #tpu.memory_space<vmem>>, vector<16x128xbf16>
      tpu.vector_store %arg8[%c0_18, %c0_19], %26 {strides = array<i32>} : memref<16x128xbf16, #tpu.memory_space<vmem>>, vector<16x128xbf16>,
    } else {
    }
    %c0 = arith.constant 0 : index
    %c0_1 = arith.constant 0 : index
    %3 = vector.load %arg8[%c0, %c0_1] : memref<16x128xbf16, #tpu.memory_space<vmem>>, vector<16x128xbf16>
    %c0_2 = arith.constant 0 : index
    %c0_3 = arith.constant 0 : index
    %4 = vector.load %arg5[%c0_2, %c0_3] : memref<128x128xbf16, #tpu.memory_space<vmem>>, vector<128x128xbf16>
    %cst = arith.constant dense<0.000000e+00> : vector<16x128xf32>
    %5 = tpu.matmul %3, %4, %cst {dimension_numbers = #tpu.dot_dimension_numbers<[1], [0], [0], [1], [0, 0, 1, 1], [], []>} : vector<16x128xbf16>, vector<128x128xbf16>, vector<16x128xf32> -> vector<16x128xf32>
    %c0_4 = arith.constant 0 : index
    %c0_5 = arith.constant 0 : index
    %6 = vector.load %arg6[%c0_4, %c0_5] : memref<1x128xf32, #tpu.memory_space<vmem>>, vector<1x128xf32>
    %7 = vector.broadcast %6 : vector<1x128xf32> to vector<16x128xf32>
    %8 = arith.addf %5, %7 : vector<16x128xf32>
    %cst_6 = arith.constant 0.000000e+00 : f32
    %9 = vector.broadcast %cst_6 : f32 to vector<16x128xf32>
    %10 = arith.maximumf %8, %9 : vector<16x128xf32>
    %11 = math.absf %8 : vector<16x128xf32>
    %cst_7 = arith.constant 0.000000e+00 : f32
    %12 = vector.broadcast %cst_7 : f32 to vector<16x128xf32>
    %13 = arith.subf %12, %11 : vector<16x128xf32>
    %14 = math.exp %13 : vector<16x128xf32>
    %15 = math.log1p %14 : vector<16x128xf32>
    %16 = arith.addf %10, %15 : vector<16x128xf32>
    %c0_8 = arith.constant 0 : index
    %c0_9 = arith.constant 0 : index
    %17 = vector.load %arg7[%c0_8, %c0_9] : memref<16x128xf32, #tpu.memory_space<vmem>>, vector<16x128xf32>
    tpu.vector_store %arg7[%c0_8, %c0_9], %16 {strides = array<i32>} : memref<16x128xf32, #tpu.memory_space<vmem>>, vector<16x128xf32>,
    return
  }
  func.func @transform_0(%arg0: i32, %arg1: i32) -> (i32, i32) {
    %c0_i32 = arith.constant 0 : i32
    %c0_i32_0 = arith.constant 0 : i32
    return %arg0, %c0_i32 : i32, i32
  }
  func.func @transform_1(%arg0: i32, %arg1: i32) -> (i32, i32) {
    %c0_i32 = arith.constant 0 : i32
    %c0_i32_0 = arith.constant 0 : i32
    %c0_i32_1 = arith.constant 0 : i32
    return %c0_i32, %c0_i32_0 : i32, i32
  }
  func.func @transform_2(%arg0: i32, %arg1: i32) -> (i32, i32) {
    %c0_i32 = arith.constant 0 : i32
    %c0_i32_0 = arith.constant 0 : i32
    %c0_i32_1 = arith.constant 0 : i32
    return %c0_i32, %c0_i32_0 : i32, i32
  }
  func.func @transform_3(%arg0: i32, %arg1: i32) -> (i32, i32) {
    %c0_i32 = arith.constant 0 : i32
    %c0_i32_0 = arith.constant 0 : i32
    return %c0_i32, %arg1 : i32, i32
  }
  func.func @transform_4(%arg0: i32, %arg1: i32) -> (i32, i32) {
    %c0_i32 = arith.constant 0 : i32
    %c0_i32_0 = arith.constant 0 : i32
    return %c0_i32, %arg1 : i32, i32
  }
  func.func @transform_5(%arg0: i32, %arg1: i32) -> (i32, i32) {
    %c0_i32 = arith.constant 0 : i32
    return %arg0, %arg1 : i32, i32
  }
}

module attributes {stable_mosaic.version = 11 : i64} {
  func.func @_decoder_kernel(%arg0: i32, %arg1: i32, %arg2: memref<16x128xbf16, #tpu.memory_space<vmem>>, %arg3: memref<128x128xbf16, #tpu.memory_space<vmem>>, %arg4: memref<1x128xf32, #tpu.memory_space<vmem>>, %arg5: memref<128x128xbf16, #tpu.memory_space<vmem>>, %arg6: memref<1x128xf32, #tpu.memory_space<vmem>>, %arg7: memref<16x128xf32, #tpu.memory_space<vmem>>, %arg8: memref<16x128xbf16, #tpu.memory_space<vmem>>) attributes {dimension_semantics = [#tpu.dimension_semantics<parallel>, #tpu.dimension_semantics<arbitrary>], iteration_bounds = array<i64: 1, 1>, scalar_prefetch = 0 : i64, scratch_operands = 1 : i64, tpu.core_type = #tpu.core_type<tc>, window_params = [{transform_indices = @transform_0, window_bounds = array<i64: 16, 128>}, {pipeline_mode = #tpu.pipeline_mode<synchronous>, transform_indices = @transform_1, window_bounds = array<i64: 128, 128>}, {pipeline_mode = #tpu.pipeline_mode<synchronous>, transform_indices = @transform_2, window_bounds = array<i64: 1, 128>}, {transform_indices = @transform_3, window_bounds = array<i64: 128, 128>}, {transform_indices = @transform_4, window_bounds = array<i64: 1, 128>}, {transform_indices = @transform_5, window_bounds = array<i64: 16, 128>}]} {
    %c0_i32 = arith.constant 0 : i32
    %0 = arith.cmpi eq, %arg1, %c0_i32 : i32
    %1 = arith.extui %0 : i1 to i32
    %c0_i32_0 = arith.constant 0 : i32
    %2 = arith.cmpi ne, %1, %c0_i32_0 : i32
    scf.if %2 {
      %c0_10 = arith.constant 0 : index
      %c0_11 = arith.constant 0 : index
      %18 = vector.load %arg2[%c0_10, %c0_11] : memref<16x128xbf16, #tpu.memory_space<vmem>>, vector<16x128xbf16>
      %c0_12 = arith.constant 0 : index
      %c0_13 = arith.constant 0 : index
      %19 = vector.load %arg3[%c0_12, %c0_13] : memref<128x128xbf16, #tpu.memory_space<vmem>>, vector<128x128xbf16>
      %cst_14 = arith.constant dense<0.000000e+00> : vector<16x128xf32>
      %20 = tpu.matmul %18, %19, %cst_14 {dimension_numbers = #tpu.dot_dimension_numbers<[1], [0], [0], [1], [0, 0, 1, 1], [], []>} : vector<16x128xbf16>, vector<128x128xbf16>, vector<16x128xf32> -> vector<16x128xf32>
      %c0_15 = arith.constant 0 : index
      %c0_16 = arith.constant 0 : index
      %21 = vector.load %arg4[%c0_15, %c0_16] : memref<1x128xf32, #tpu.memory_space<vmem>>, vector<1x128xf32>
      %22 = vector.broadcast %21 : vector<1x128xf32> to vector<16x128xf32>
      %23 = arith.addf %20, %22 : vector<16x128xf32>
      %cst_17 = arith.constant 0.000000e+00 : f32
      %24 = vector.broadcast %cst_17 : f32 to vector<16x128xf32>
      %25 = arith.maximumf %23, %24 : vector<16x128xf32>
      %26 = arith.truncf %25 : vector<16x128xf32> to vector<16x128xbf16>
      %c0_18 = arith.constant 0 : index
      %c0_19 = arith.constant 0 : index
      %27 = vector.load %arg8[%c0_18, %c0_19] : memref<16x128xbf16, #tpu.memory_space<vmem>>, vector<16x128xbf16>
      tpu.vector_store %arg8[%c0_18, %c0_19], %26 {strides = array<i32>} : memref<16x128xbf16, #tpu.memory_space<vmem>>, vector<16x128xbf16>,
    } else {
    }
    %c0 = arith.constant 0 : index
    %c0_1 = arith.constant 0 : index
    %3 = vector.load %arg8[%c0, %c0_1] : memref<16x128xbf16, #tpu.memory_space<vmem>>, vector<16x128xbf16>
    %c0_2 = arith.constant 0 : index
    %c0_3 = arith.constant 0 : index
    %4 = vector.load %arg5[%c0_2, %c0_3] : memref<128x128xbf16, #tpu.memory_space<vmem>>, vector<128x128xbf16>
    %cst = arith.constant dense<0.000000e+00> : vector<16x128xf32>
    %5 = tpu.matmul %3, %4, %cst {dimension_numbers = #tpu.dot_dimension_numbers<[1], [0], [0], [1], [0, 0, 1, 1], [], []>} : vector<16x128xbf16>, vector<128x128xbf16>, vector<16x128xf32> -> vector<16x128xf32>
    %c0_4 = arith.constant 0 : index
    %c0_5 = arith.constant 0 : index
    %6 = vector.load %arg6[%c0_4, %c0_5] : memref<1x128xf32, #tpu.memory_space<vmem>>, vector<1x128xf32>
    %7 = vector.broadcast %6 : vector<1x128xf32> to vector<16x128xf32>
    %8 = arith.addf %5, %7 : vector<16x128xf32>
    %cst_6 = arith.constant 0.000000e+00 : f32
    %9 = vector.broadcast %cst_6 : f32 to vector<16x128xf32>
    %10 = arith.maximumf %8, %9 : vector<16x128xf32>
    %11 = math.absf %8 : vector<16x128xf32>
    %cst_7 = arith.constant 0.000000e+00 : f32
    %12 = vector.broadcast %cst_7 : f32 to vector<16x128xf32>
    %13 = arith.subf %12, %11 : vector<16x128xf32>
    %14 = math.exp %13 : vector<16x128xf32>
    %15 = math.log1p %14 : vector<16x128xf32>
    %16 = arith.addf %10, %15 : vector<16x128xf32>
    %c0_8 = arith.constant 0 : index
    %c0_9 = arith.constant 0 : index
    %17 = vector.load %arg7[%c0_8, %c0_9] : memref<16x128xf32, #tpu.memory_space<vmem>>, vector<16x128xf32>
    tpu.vector_store %arg7[%c0_8, %c0_9], %16 {strides = array<i32>} : memref<16x128xf32, #tpu.memory_space<vmem>>, vector<16x128xf32>,
    return
  }
  func.func @transform_0(%arg0: i32, %arg1: i32) -> (i32, i32) {
    %c0_i32 = arith.constant 0 : i32
    %c0_i32_0 = arith.constant 0 : i32
    return %arg0, %c0_i32 : i32, i32
  }
  func.func @transform_1(%arg0: i32, %arg1: i32) -> (i32, i32) {
    %c0_i32 = arith.constant 0 : i32
    %c0_i32_0 = arith.constant 0 : i32
    %c0_i32_1 = arith.constant 0 : i32
    return %c0_i32, %c0_i32_0 : i32, i32
  }
  func.func @transform_2(%arg0: i32, %arg1: i32) -> (i32, i32) {
    %c0_i32 = arith.constant 0 : i32
    %c0_i32_0 = arith.constant 0 : i32
    %c0_i32_1 = arith.constant 0 : i32
    return %c0_i32, %c0_i32_0 : i32, i32
  }
  func.func @transform_3(%arg0: i32, %arg1: i32) -> (i32, i32) {
    %c0_i32 = arith.constant 0 : i32
    %c0_i32_0 = arith.constant 0 : i32
    return %c0_i32, %arg1 : i32, i32
  }
  func.func @transform_4(%arg0: i32, %arg1: i32) -> (i32, i32) {
    %c0_i32 = arith.constant 0 : i32
    %c0_i32_0 = arith.constant 0 : i32
    return %c0_i32, %arg1 : i32, i32
  }
  func.func @transform_5(%arg0: i32, %arg1: i32) -> (i32, i32) {
    %c0_i32 = arith.constant 0 : i32
    return %arg0, %arg1 : i32, i32
  }
}

</mosaic_0001>

<llo_original>
// kernel: tpu_custom_call.1
$region0: #{tpu_custom_call.1}
  #allocation0 [shape = 'u32[]', space=smem, size = 0x4, offset = 0x4, fixed_abs, tag = 'smem constant byte address 0x4 - core index']
  #allocation1 [shape = 'u32[144,128]{1,0:T(1,128)}', space=vmem, size = 0x12000, scoped, tag = 'internal scratch']
  #allocation2 [shape = 'bf16[16,128]{1,0:T(8,128)(2,1)}', space=vmem, size = 0x1000, scoped, tag = 'scratch operand']
  %s0 = inlined_call_operand.hbm [shape: bf16[16,128], index: 0, kind: input, shape index: {}]
  %s1 = inlined_call_operand.hbm [shape: bf16[128,128], index: 1, kind: input, shape index: {}]
  %s2 = inlined_call_operand.vmem [shape: f32[1,128], index: 2, kind: input, shape index: {}]
  %s3 = inlined_call_operand.hbm [shape: bf16[128,128], index: 3, kind: input, shape index: {}]
  %s4 = inlined_call_operand.vmem [shape: f32[1,128], index: 4, kind: input, shape index: {}]
  %s5 = inlined_call_operand.hbm [shape: f32[16,128], index: 5, kind: output, shape index: {}]
  %s6 = sld [smem:[#allocation0]]
  $region46: #{tpu_custom_call.1} parent=0
    _
  %s8 = ssub.s32 1, %s6
  %s9 = scalar_select 0, %s8, %s6
  $region1: #{tpu_custom_call.1} parent=0
    #allocation3 [shape = 'u8[4096]{0}', space=vmem, size = 0x1000, scoped, tag = 'input window, operand 0, single buffered']
    #allocation4 [shape = 's32[1]{0}', space=sflag, size = 0x4, scoped, tag = 'scoped memory for tpu_custom_call.1']
    #allocation5 [shape = 's32[1]{0}', space=sflag, size = 0x4, scoped, tag = 'scoped memory for tpu_custom_call.1']
    #allocation6 [shape = 'u8[32768]{0}', space=vmem, size = 0x8000, scoped, tag = 'input window, operand 1, single buffered']
    #allocation7 [shape = 's32[1]{0}', space=sflag, size = 0x4, scoped, tag = 'scoped memory for tpu_custom_call.1']
    #allocation8 [shape = 'u8[32768]{0}', space=vmem, size = 0x8000, scoped, tag = 'input window, operand 3, single buffered']
    #allocation9 [shape = 'u8[8192]{0}', space=vmem, size = 0x2000, scoped, tag = 'output window, operand 0, single buffered']
    %10 = vsyncpa [#allocation4], 0
    %11 = vsyncpa [#allocation7], 0
    %12 = vsyncpa [#allocation5], 0
    // Predicated region
    $region2: #{tpu_custom_call.1} parent=1 // pred_check
      _
    $region3: #{tpu_custom_call.1} parent=1 // pred_check_branch
      %14 = sbr.rel (0) target = $region5
    $region4: #{tpu_custom_call.1} parent=1 // pred_region
      %s16 = ssub.s32 128, 128
      %17 = vsyncadd [#allocation4], %s16
      %s18 = sshll.u32 [#allocation3], 4
      %s19 = int_to_ptr.vmem [resolvable:$true] %s18
      %24 = dma.hbm_to_vmem [thread:$0]  %s0, 128, %s19, [#allocation4], 64, 64, 4
    $region5: #{tpu_custom_call.1} parent=1 // pred_fallthru
      _
    // Predicated region
    $region6: #{tpu_custom_call.1} parent=1 // pred_check
      _
    $region7: #{tpu_custom_call.1} parent=1 // pred_check_branch
      %26 = sbr.rel (0) target = $region9
    $region8: #{tpu_custom_call.1} parent=1 // pred_region
      %s28 = ssub.s32 1024, 1024
      %29 = vsyncadd [#allocation7], %s28
      %s30 = sshll.u32 [#allocation6], 4
      %s31 = int_to_ptr.vmem [resolvable:$true] %s30
      %36 = dma.hbm_to_vmem [thread:$0]  %s1, 1024, %s31, [#allocation7], 64, 64, 4
    $region9: #{tpu_custom_call.1} parent=1 // pred_fallthru
      _
    // Predicated region
    $region10: #{tpu_custom_call.1} parent=1 // pred_check
      _
    $region11: #{tpu_custom_call.1} parent=1 // pred_check_branch
      %38 = sbr.rel (0) target = $region13
    $region12: #{tpu_custom_call.1} parent=1 // pred_region
      _
    $region13: #{tpu_custom_call.1} parent=1 // pred_fallthru
      _
    // Predicated region
    $region14: #{tpu_custom_call.1} parent=1 // pred_check
      _
    $region15: #{tpu_custom_call.1} parent=1 // pred_check_branch
      %40 = sbr.rel (0) target = $region17
    $region16: #{tpu_custom_call.1} parent=1 // pred_region
      %s42 = ssub.s32 1024, 1024
      %43 = vsyncadd [#allocation7], %s42
      %s44 = sshll.u32 [#allocation8], 4
      %s45 = int_to_ptr.vmem [resolvable:$true] %s44
      %50 = dma.hbm_to_vmem [thread:$0]  %s3, 1024, %s45, [#allocation7], 64, 64, 4
    $region17: #{tpu_custom_call.1} parent=1 // pred_fallthru
      _
    // Predicated region
    $region18: #{tpu_custom_call.1} parent=1 // pred_check
      _
    $region19: #{tpu_custom_call.1} parent=1 // pred_check_branch
      %52 = sbr.rel (0) target = $region21
    $region20: #{tpu_custom_call.1} parent=1 // pred_region
      _
    $region21: #{tpu_custom_call.1} parent=1 // pred_fallthru
      _
    // Predicated region
    $region22: #{tpu_custom_call.1} parent=1 // pred_check
      _
    $region23: #{tpu_custom_call.1} parent=1 // pred_check_branch
      %54 = sbr.rel (0) target = $region25
    $region24: #{tpu_custom_call.1} parent=1 // pred_region
      %55 = dma.done [#allocation4], 128
    $region25: #{tpu_custom_call.1} parent=1 // pred_fallthru
      _
    // Predicated region
    $region26: #{tpu_custom_call.1} parent=1 // pred_check
      _
    $region27: #{tpu_custom_call.1} parent=1 // pred_check_branch
      %57 = sbr.rel (0) target = $region29
    $region28: #{tpu_custom_call.1} parent=1 // pred_region
      %58 = dma.done [#allocation7], 1024
    $region29: #{tpu_custom_call.1} parent=1 // pred_fallthru
      _
    // Predicated region
    $region30: #{tpu_custom_call.1} parent=1 // pred_check
      _
    $region31: #{tpu_custom_call.1} parent=1 // pred_check_branch
      %60 = sbr.rel (0) target = $region33
    $region32: #{tpu_custom_call.1} parent=1 // pred_region
      %61 = dma.done [#allocation7], 1024
    $region33: #{tpu_custom_call.1} parent=1 // pred_fallthru
      _
    %p63 = scmp.eq.s32.totalorder 0, 0
    // Predicated region
    $region34: #{tpu_custom_call.1} parent=1 // pred_check
      %p64 = pneg %p63
    $region35: #{tpu_custom_call.1} parent=1 // pred_check_branch
      %66 = sbr.rel (%p64) target = $region37
    $region36: #{tpu_custom_call.1} parent=1 // pred_region
      %v67 = vld [vmem:[#allocation3] sm:$0xf]
      %v68 = vld [vmem:[#allocation3 + $0x4] sm:$0xf]
      %v69 = vld [vmem:[#allocation6] sm:$0xf]
      %v70 = vld [vmem:[#allocation6 + $0x4] sm:$0xf]
      %v71 = vld [vmem:[#allocation6 + $0x8] sm:$0xf]
      %v72 = vld [vmem:[#allocation6 + $0xc] sm:$0xf]
      %v73 = vld [vmem:[#allocation6 + $0x10] sm:$0xf]
      %v74 = vld [vmem:[#allocation6 + $0x14] sm:$0xf]
      %v75 = vld [vmem:[#allocation6 + $0x18] sm:$0xf]
      %v76 = vld [vmem:[#allocation6 + $0x1c] sm:$0xf]
      %v77 = vld [vmem:[#allocation6 + $0x20] sm:$0xf]
      %v78 = vld [vmem:[#allocation6 + $0x24] sm:$0xf]
      %v79 = vld [vmem:[#allocation6 + $0x28] sm:$0xf]
      %v80 = vld [vmem:[#allocation6 + $0x2c] sm:$0xf]
      %v81 = vld [vmem:[#allocation6 + $0x30] sm:$0xf]
      %v82 = vld [vmem:[#allocation6 + $0x34] sm:$0xf]
      %v83 = vld [vmem:[#allocation6 + $0x38] sm:$0xf]
      %v84 = vld [vmem:[#allocation6 + $0x3c] sm:$0xf]
      %v85 = vld [vmem:[%s2] sm:$0x1]
      %v87 = vlaneseq
      %v88 = vshrl.u32 %v87, 7
      %v89 = vsub.s32 0, %v88
      %v90 = vrot.slane %v85, %v89
      %v94 = vunpack.c.l.b16 %v67
      %v95 = vunpack.c.l.b16 %v68
      %v96 = vpack.c.b16 %v95, %v94
      %v114 = vunpack.c.l.b16 %v69
      %v115 = vunpack.c.l.b16 %v70
      %v116 = vunpack.c.l.b16 %v71
      %v117 = vunpack.c.l.b16 %v72
      %v118 = vunpack.c.l.b16 %v73
      %v119 = vunpack.c.l.b16 %v74
      %v120 = vunpack.c.l.b16 %v75
      %v121 = vunpack.c.l.b16 %v76
      %v122 = vunpack.c.l.b16 %v77
      %v123 = vunpack.c.l.b16 %v78
      %v124 = vunpack.c.l.b16 %v79
      %v125 = vunpack.c.l.b16 %v80
      %v126 = vunpack.c.l.b16 %v81
      %v127 = vunpack.c.l.b16 %v82
      %v128 = vunpack.c.l.b16 %v83
      %v129 = vunpack.c.l.b16 %v84
      %v130 = vpack.c.b16 %v115, %v114
      %v131 = vpack.c.b16 %v117, %v116
      %v132 = vpack.c.b16 %v119, %v118
      %v133 = vpack.c.b16 %v121, %v120
      %v134 = vpack.c.b16 %v123, %v122
      %v135 = vpack.c.b16 %v125, %v124
      %v136 = vpack.c.b16 %v127, %v126
      %v137 = vpack.c.b16 %v129, %v128
      %146 = vmatprep.subr.bf16.mxu0 0
      %147 = vmatpush1.bf16.msra.mxu0 %v137
      %148 = vmatprep.subr.bf16.mxu0 0
      %149 = vmatpush1.bf16.msra.mxu0 %v136
      %150 = vmatprep.subr.bf16.mxu0 0
      %151 = vmatpush1.bf16.msra.mxu0 %v135
      %152 = vmatprep.subr.bf16.mxu0 0
      %153 = vmatpush1.bf16.msra.mxu0 %v134
      %154 = vmatprep.subr.bf16.mxu0 0
      %155 = vmatpush1.bf16.msra.mxu0 %v133
      %156 = vmatprep.subr.bf16.mxu0 0
      %157 = vmatpush1.bf16.msra.mxu0 %v132
      %158 = vmatprep.subr.bf16.mxu0 0
      %159 = vmatpush1.bf16.msra.mxu0 %v131
      %160 = vmatprep.subr.bf16.mxu0 0
      %161 = vmatpush1.bf16.msra.mxu0 %v130
      %162 = vmatprep.subr.bf16.mxu0 0
      %163 = vmatpush2.bf16.msra.mxu0 0
      %164 = vmatprep.subr.bf16.mxu0 0
      %165 = vmatpush2.bf16.msra.mxu0 0
      %166 = vmatprep.subr.bf16.mxu0 0
      %167 = vmatpush2.bf16.msra.mxu0 0
      %168 = vmatprep.subr.bf16.mxu0 0
      %169 = vmatpush2.bf16.msra.mxu0 0
      %170 = vmatprep.subr.bf16.mxu0 0
      %171 = vmatpush2.bf16.msra.mxu0 0
      %172 = vmatprep.subr.bf16.mxu0 0
      %173 = vmatpush2.bf16.msra.mxu0 0
      %174 = vmatprep.subr.bf16.mxu0 0
      %175 = vmatpush2.bf16.msra.mxu0 0
      %176 = vmatprep.subr.bf16.mxu0 0
      %177 = vmatpush2.bf16.msra.mxu0 0
      %178 = vmatprep.mubr.bf16.mxu0 0
      %179 = vmatmul.mubr.bf16.gmra.mxu0 %v96
      %v180 = vpop.f32.mrf.mxu0
      %v181 = vadd.f32 %v90, %v180
      %v182 = vpop.f32.mrf.mxu0
      %v183 = vpop.f32.mrf.mxu0
      %v184 = vadd.f32 %v90, %v183
      %v185 = vpop.f32.mrf.mxu0
      %186 = vdwg.mxu0
      %v187 = vmax.f32 %v181, 0.0
      %v188 = vmax.f32 %v184, 0.0
      %v189 = vpack.c.bf16 %v188, %v187
      %v191 = vunpack.c.l.b16 %v189
      %v192 = vunpack.c.h.b16 %v189
      %v193 = vpack.c.b16 %v191, %v191
      %v194 = vpack.c.b16 %v192, %v192
      %197 = vst [vmem:[#allocation2] sm:$0xf] %v193
      %198 = vst [vmem:[#allocation2 + $0x4] sm:$0xf] %v194
    $region37: #{tpu_custom_call.1} parent=1 // pred_fallthru
      _
    %v199 = vld [vmem:[#allocation2] sm:$0xf]
    %v200 = vld [vmem:[#allocation2 + $0x4] sm:$0xf]
    %v201 = vld [vmem:[#allocation8] sm:$0xf]
    %v202 = vld [vmem:[#allocation8 + $0x4] sm:$0xf]
    %v203 = vld [vmem:[#allocation8 + $0x8] sm:$0xf]
    %v204 = vld [vmem:[#allocation8 + $0xc] sm:$0xf]
    %v205 = vld [vmem:[#allocation8 + $0x10] sm:$0xf]
    %v206 = vld [vmem:[#allocation8 + $0x14] sm:$0xf]
    %v207 = vld [vmem:[#allocation8 + $0x18] sm:$0xf]
    %v208 = vld [vmem:[#allocation8 + $0x1c] sm:$0xf]
    %v209 = vld [vmem:[#allocation8 + $0x20] sm:$0xf]
    %v210 = vld [vmem:[#allocation8 + $0x24] sm:$0xf]
    %v211 = vld [vmem:[#allocation8 + $0x28] sm:$0xf]
    %v212 = vld [vmem:[#allocation8 + $0x2c] sm:$0xf]
    %v213 = vld [vmem:[#allocation8 + $0x30] sm:$0xf]
    %v214 = vld [vmem:[#allocation8 + $0x34] sm:$0xf]
    %v215 = vld [vmem:[#allocation8 + $0x38] sm:$0xf]
    %v216 = vld [vmem:[#allocation8 + $0x3c] sm:$0xf]
    %v217 = vld [vmem:[%s4] sm:$0x1]
    %v219 = vlaneseq
    %v220 = vshrl.u32 %v219, 7
    %v221 = vsub.s32 0, %v220
    %v222 = vrot.slane %v217, %v221
    %v226 = vunpack.c.l.b16 %v199
    %v227 = vunpack.c.l.b16 %v200
    %v228 = vpack.c.b16 %v227, %v226
    %v246 = vunpack.c.l.b16 %v201
    %v247 = vunpack.c.l.b16 %v202
    %v248 = vunpack.c.l.b16 %v203
    %v249 = vunpack.c.l.b16 %v204
    %v250 = vunpack.c.l.b16 %v205
    %v251 = vunpack.c.l.b16 %v206
    %v252 = vunpack.c.l.b16 %v207
    %v253 = vunpack.c.l.b16 %v208
    %v254 = vunpack.c.l.b16 %v209
    %v255 = vunpack.c.l.b16 %v210
    %v256 = vunpack.c.l.b16 %v211
    %v257 = vunpack.c.l.b16 %v212
    %v258 = vunpack.c.l.b16 %v213
    %v259 = vunpack.c.l.b16 %v214
    %v260 = vunpack.c.l.b16 %v215
    %v261 = vunpack.c.l.b16 %v216
    %v262 = vpack.c.b16 %v247, %v246
    %v263 = vpack.c.b16 %v249, %v248
    %v264 = vpack.c.b16 %v251, %v250
    %v265 = vpack.c.b16 %v253, %v252
    %v266 = vpack.c.b16 %v255, %v254
    %v267 = vpack.c.b16 %v257, %v256
    %v268 = vpack.c.b16 %v259, %v258
    %v269 = vpack.c.b16 %v261, %v260
    %278 = vmatprep.subr.bf16.mxu0 0
    %279 = vmatpush1.bf16.msra.mxu0 %v269
    %280 = vmatprep.subr.bf16.mxu0 0
    %281 = vmatpush1.bf16.msra.mxu0 %v268
    %282 = vmatprep.subr.bf16.mxu0 0
    %283 = vmatpush1.bf16.msra.mxu0 %v267
    %284 = vmatprep.subr.bf16.mxu0 0
    %285 = vmatpush1.bf16.msra.mxu0 %v266
    %286 = vmatprep.subr.bf16.mxu0 0
    %287 = vmatpush1.bf16.msra.mxu0 %v265
    %288 = vmatprep.subr.bf16.mxu0 0
    %289 = vmatpush1.bf16.msra.mxu0 %v264
    %290 = vmatprep.subr.bf16.mxu0 0
    %291 = vmatpush1.bf16.msra.mxu0 %v263
    %292 = vmatprep.subr.bf16.mxu0 0
    %293 = vmatpush1.bf16.msra.mxu0 %v262
    %294 = vmatprep.subr.bf16.mxu0 0
    %295 = vmatpush2.bf16.msra.mxu0 0
    %296 = vmatprep.subr.bf16.mxu0 0
    %297 = vmatpush2.bf16.msra.mxu0 0
    %298 = vmatprep.subr.bf16.mxu0 0
    %299 = vmatpush2.bf16.msra.mxu0 0
    %300 = vmatprep.subr.bf16.mxu0 0
    %301 = vmatpush2.bf16.msra.mxu0 0
    %302 = vmatprep.subr.bf16.mxu0 0
    %303 = vmatpush2.bf16.msra.mxu0 0
    %304 = vmatprep.subr.bf16.mxu0 0
    %305 = vmatpush2.bf16.msra.mxu0 0
    %306 = vmatprep.subr.bf16.mxu0 0
    %307 = vmatpush2.bf16.msra.mxu0 0
    %308 = vmatprep.subr.bf16.mxu0 0
    %309 = vmatpush2.bf16.msra.mxu0 0
    %310 = vmatprep.mubr.bf16.mxu0 0
    %311 = vmatmul.mubr.bf16.gmra.mxu0 %v228
    %v312 = vpop.f32.mrf.mxu0
    %v313 = vadd.f32 %v222, %v312
    %v314 = vpop.f32.mrf.mxu0
    %v315 = vpop.f32.mrf.mxu0
    %v316 = vadd.f32 %v222, %v315
    %v317 = vpop.f32.mrf.mxu0
    %318 = vdwg.mxu0
    %v319 = vmax.f32 %v313, 0.0
    %v320 = vmax.f32 %v316, 0.0
    %v321 = vand.u32 2147483647, %v313
    %v322 = vand.u32 2147483647, %v316
    %v323 = vsub.f32 0.0, %v321
    %v324 = vsub.f32 0.0, %v322
    %v325 = vmul.f32 %v323, 1.442695
    %v326 = vpow.pop %v325
    %v327 = vmul.f32 %v324, 1.442695
    %v328 = vpow.pop %v327
    %v329 = vadd.f32 %v326, 1.0
    %v330 = vlog2.pop %v329
    %v331 = vmul.f32 %v330, 0.6931472
    %v332 = vmul.f32 -0.5, %v326
    %v333 = vadd.f32 %v332, 1.0
    %v334 = vmul.f32 %v333, %v326
    %v335 = vand.u32 2147483647, %v326
    %vm336 = vcmp.lt.f32.partialorder %v335, 0.0004427343
    %v337 = vsel %vm336, %v334, %v331
    %v338 = vadd.f32 %v328, 1.0
    %v339 = vlog2.pop %v338
    %v340 = vmul.f32 %v339, 0.6931472
    %v341 = vmul.f32 -0.5, %v328
    %v342 = vadd.f32 %v341, 1.0
    %v343 = vmul.f32 %v342, %v328
    %v344 = vand.u32 2147483647, %v328
    %vm345 = vcmp.lt.f32.partialorder %v344, 0.0004427343
    %v346 = vsel %vm345, %v343, %v340
    %v347 = vadd.f32 %v319, %v337
    %v348 = vadd.f32 %v320, %v346
    %349 = vst [vmem:[#allocation9] sm:$0xff] %v347
    %350 = vst [vmem:[#allocation9 + $0x8] sm:$0xff] %v348
    // Predicated region
    $region38: #{tpu_custom_call.1} parent=1 // pred_check
      _
    $region39: #{tpu_custom_call.1} parent=1 // pred_check_branch
      %352 = sbr.rel (0) target = $region41
    $region40: #{tpu_custom_call.1} parent=1 // pred_region
      %s354 = ssub.s32 256, 256
      %355 = vsyncadd [#allocation5], %s354
      %s356 = sshll.u32 [#allocation9], 4
      %s357 = int_to_ptr.vmem [resolvable:$true] %s356
      %362 = dma.vmem_to_hbm [thread:$0]  %s357, 256, %s5, [#allocation5], 128, 128, 8
    $region41: #{tpu_custom_call.1} parent=1 // pred_fallthru
      _
    // Predicated region
    $region42: #{tpu_custom_call.1} parent=1 // pred_check
      _
    $region43: #{tpu_custom_call.1} parent=1 // pred_check_branch
      %364 = sbr.rel (0) target = $region45
    $region44: #{tpu_custom_call.1} parent=1 // pred_region
      %365 = dma.done [#allocation5], 256
    $region45: #{tpu_custom_call.1} parent=1 // pred_fallthru
      _
    %366 = vsyncpa [#allocation4], 1
    %367 = vsyncpa [#allocation7], 1
    %368 = vsyncpa [#allocation5], 1

// kernel: tpu_custom_call.1
$region0: #{tpu_custom_call.1}
  #allocation0 [shape = 'u32[]', space=smem, size = 0x4, offset = 0x4, fixed_abs, tag = 'smem constant byte address 0x4 - core index']
  #allocation1 [shape = 'u32[144,128]{1,0:T(1,128)}', space=vmem, size = 0x12000, scoped, tag = 'internal scratch']
  #allocation2 [shape = 'bf16[16,128]{1,0:T(8,128)(2,1)}', space=vmem, size = 0x1000, scoped, tag = 'scratch operand']
  %s0 = inlined_call_operand.hbm [shape: bf16[16,128], index: 0, kind: input, shape index: {}]
  %s1 = inlined_call_operand.hbm [shape: bf16[128,128], index: 1, kind: input, shape index: {}]
  %s2 = inlined_call_operand.vmem [shape: f32[1,128], index: 2, kind: input, shape index: {}]
  %s3 = inlined_call_operand.hbm [shape: bf16[128,128], index: 3, kind: input, shape index: {}]
  %s4 = inlined_call_operand.vmem [shape: f32[1,128], index: 4, kind: input, shape index: {}]
  %s5 = inlined_call_operand.hbm [shape: f32[16,128], index: 5, kind: output, shape index: {}]
  %s6 = sld [smem:[#allocation0]]
  $region46: #{tpu_custom_call.1} parent=0
    _
  %s8 = ssub.s32 1, %s6
  %s9 = scalar_select 0, %s8, %s6
  $region1: #{tpu_custom_call.1} parent=0
    #allocation3 [shape = 'u8[4096]{0}', space=vmem, size = 0x1000, scoped, tag = 'input window, operand 0, single buffered']
    #allocation4 [shape = 's32[1]{0}', space=sflag, size = 0x4, scoped, tag = 'scoped memory for tpu_custom_call.1']
    #allocation5 [shape = 's32[1]{0}', space=sflag, size = 0x4, scoped, tag = 'scoped memory for tpu_custom_call.1']
    #allocation6 [shape = 'u8[32768]{0}', space=vmem, size = 0x8000, scoped, tag = 'input window, operand 1, single buffered']
    #allocation7 [shape = 's32[1]{0}', space=sflag, size = 0x4, scoped, tag = 'scoped memory for tpu_custom_call.1']
    #allocation8 [shape = 'u8[32768]{0}', space=vmem, size = 0x8000, scoped, tag = 'input window, operand 3, single buffered']
    #allocation9 [shape = 'u8[8192]{0}', space=vmem, size = 0x2000, scoped, tag = 'output window, operand 0, single buffered']
    %10 = vsyncpa [#allocation4], 0
    %11 = vsyncpa [#allocation7], 0
    %12 = vsyncpa [#allocation5], 0
    // Predicated region
    $region2: #{tpu_custom_call.1} parent=1 // pred_check
      _
    $region3: #{tpu_custom_call.1} parent=1 // pred_check_branch
      %14 = sbr.rel (0) target = $region5
    $region4: #{tpu_custom_call.1} parent=1 // pred_region
      %s16 = ssub.s32 128, 128
      %17 = vsyncadd [#allocation4], %s16
      %s18 = sshll.u32 [#allocation3], 4
      %s19 = int_to_ptr.vmem [resolvable:$true] %s18
      %24 = dma.hbm_to_vmem [thread:$0]  %s0, 128, %s19, [#allocation4], 64, 64, 4
    $region5: #{tpu_custom_call.1} parent=1 // pred_fallthru
      _
    // Predicated region
    $region6: #{tpu_custom_call.1} parent=1 // pred_check
      _
    $region7: #{tpu_custom_call.1} parent=1 // pred_check_branch
      %26 = sbr.rel (0) target = $region9
    $region8: #{tpu_custom_call.1} parent=1 // pred_region
      %s28 = ssub.s32 1024, 1024
      %29 = vsyncadd [#allocation7], %s28
      %s30 = sshll.u32 [#allocation6], 4
      %s31 = int_to_ptr.vmem [resolvable:$true] %s30
      %36 = dma.hbm_to_vmem [thread:$0]  %s1, 1024, %s31, [#allocation7], 64, 64, 4
    $region9: #{tpu_custom_call.1} parent=1 // pred_fallthru
      _
    // Predicated region
    $region10: #{tpu_custom_call.1} parent=1 // pred_check
      _
    $region11: #{tpu_custom_call.1} parent=1 // pred_check_branch
      %38 = sbr.rel (0) target = $region13
    $region12: #{tpu_custom_call.1} parent=1 // pred_region
      _
    $region13: #{tpu_custom_call.1} parent=1 // pred_fallthru
      _
    // Predicated region
    $region14: #{tpu_custom_call.1} parent=1 // pred_check
      _
    $region15: #{tpu_custom_call.1} parent=1 // pred_check_branch
      %40 = sbr.rel (0) target = $region17
    $region16: #{tpu_custom_call.1} parent=1 // pred_region
      %s42 = ssub.s32 1024, 1024
      %43 = vsyncadd [#allocation7], %s42
      %s44 = sshll.u32 [#allocation8], 4
      %s45 = int_to_ptr.vmem [resolvable:$true] %s44
      %50 = dma.hbm_to_vmem [thread:$0]  %s3, 1024, %s45, [#allocation7], 64, 64, 4
    $region17: #{tpu_custom_call.1} parent=1 // pred_fallthru
      _
    // Predicated region
    $region18: #{tpu_custom_call.1} parent=1 // pred_check
      _
    $region19: #{tpu_custom_call.1} parent=1 // pred_check_branch
      %52 = sbr.rel (0) target = $region21
    $region20: #{tpu_custom_call.1} parent=1 // pred_region
      _
    $region21: #{tpu_custom_call.1} parent=1 // pred_fallthru
      _
    // Predicated region
    $region22: #{tpu_custom_call.1} parent=1 // pred_check
      _
    $region23: #{tpu_custom_call.1} parent=1 // pred_check_branch
      %54 = sbr.rel (0) target = $region25
    $region24: #{tpu_custom_call.1} parent=1 // pred_region
      %55 = dma.done [#allocation4], 128
    $region25: #{tpu_custom_call.1} parent=1 // pred_fallthru
      _
    // Predicated region
    $region26: #{tpu_custom_call.1} parent=1 // pred_check
      _
    $region27: #{tpu_custom_call.1} parent=1 // pred_check_branch
      %57 = sbr.rel (0) target = $region29
    $region28: #{tpu_custom_call.1} parent=1 // pred_region
      %58 = dma.done [#allocation7], 1024
    $region29: #{tpu_custom_call.1} parent=1 // pred_fallthru
      _
    // Predicated region
    $region30: #{tpu_custom_call.1} parent=1 // pred_check
      _
    $region31: #{tpu_custom_call.1} parent=1 // pred_check_branch
      %60 = sbr.rel (0) target = $region33
    $region32: #{tpu_custom_call.1} parent=1 // pred_region
      %61 = dma.done [#allocation7], 1024
    $region33: #{tpu_custom_call.1} parent=1 // pred_fallthru
      _
    %p63 = scmp.eq.s32.totalorder 0, 0
    // Predicated region
    $region34: #{tpu_custom_call.1} parent=1 // pred_check
      %p64 = pneg %p63
    $region35: #{tpu_custom_call.1} parent=1 // pred_check_branch
      %66 = sbr.rel (%p64) target = $region37
    $region36: #{tpu_custom_call.1} parent=1 // pred_region
      %v67 = vld [vmem:[#allocation3] sm:$0xf]
      %v68 = vld [vmem:[#allocation3 + $0x4] sm:$0xf]
      %v69 = vld [vmem:[#allocation6] sm:$0xf]
      %v70 = vld [vmem:[#allocation6 + $0x4] sm:$0xf]
      %v71 = vld [vmem:[#allocation6 + $0x8] sm:$0xf]
      %v72 = vld [vmem:[#allocation6 + $0xc] sm:$0xf]
      %v73 = vld [vmem:[#allocation6 + $0x10] sm:$0xf]
      %v74 = vld [vmem:[#allocation6 + $0x14] sm:$0xf]
      %v75 = vld [vmem:[#allocation6 + $0x18] sm:$0xf]
      %v76 = vld [vmem:[#allocation6 + $0x1c] sm:$0xf]
      %v77 = vld [vmem:[#allocation6 + $0x20] sm:$0xf]
      %v78 = vld [vmem:[#allocation6 + $0x24] sm:$0xf]
      %v79 = vld [vmem:[#allocation6 + $0x28] sm:$0xf]
      %v80 = vld [vmem:[#allocation6 + $0x2c] sm:$0xf]
      %v81 = vld [vmem:[#allocation6 + $0x30] sm:$0xf]
      %v82 = vld [vmem:[#allocation6 + $0x34] sm:$0xf]
      %v83 = vld [vmem:[#allocation6 + $0x38] sm:$0xf]
      %v84 = vld [vmem:[#allocation6 + $0x3c] sm:$0xf]
      %v85 = vld [vmem:[%s2] sm:$0x1]
      %v87 = vlaneseq
      %v88 = vshrl.u32 %v87, 7
      %v89 = vsub.s32 0, %v88
      %v90 = vrot.slane %v85, %v89
      %v94 = vunpack.c.l.b16 %v67
      %v95 = vunpack.c.l.b16 %v68
      %v96 = vpack.c.b16 %v95, %v94
      %v114 = vunpack.c.l.b16 %v69
      %v115 = vunpack.c.l.b16 %v70
      %v116 = vunpack.c.l.b16 %v71
      %v117 = vunpack.c.l.b16 %v72
      %v118 = vunpack.c.l.b16 %v73
      %v119 = vunpack.c.l.b16 %v74
      %v120 = vunpack.c.l.b16 %v75
      %v121 = vunpack.c.l.b16 %v76
      %v122 = vunpack.c.l.b16 %v77
      %v123 = vunpack.c.l.b16 %v78
      %v124 = vunpack.c.l.b16 %v79
      %v125 = vunpack.c.l.b16 %v80
      %v126 = vunpack.c.l.b16 %v81
      %v127 = vunpack.c.l.b16 %v82
      %v128 = vunpack.c.l.b16 %v83
      %v129 = vunpack.c.l.b16 %v84
      %v130 = vpack.c.b16 %v115, %v114
      %v131 = vpack.c.b16 %v117, %v116
      %v132 = vpack.c.b16 %v119, %v118
      %v133 = vpack.c.b16 %v121, %v120
      %v134 = vpack.c.b16 %v123, %v122
      %v135 = vpack.c.b16 %v125, %v124
      %v136 = vpack.c.b16 %v127, %v126
      %v137 = vpack.c.b16 %v129, %v128
      %146 = vmatprep.subr.bf16.mxu0 0
      %147 = vmatpush1.bf16.msra.mxu0 %v137
      %148 = vmatprep.subr.bf16.mxu0 0
      %149 = vmatpush1.bf16.msra.mxu0 %v136
      %150 = vmatprep.subr.bf16.mxu0 0
      %151 = vmatpush1.bf16.msra.mxu0 %v135
      %152 = vmatprep.subr.bf16.mxu0 0
      %153 = vmatpush1.bf16.msra.mxu0 %v134
      %154 = vmatprep.subr.bf16.mxu0 0
      %155 = vmatpush1.bf16.msra.mxu0 %v133
      %156 = vmatprep.subr.bf16.mxu0 0
      %157 = vmatpush1.bf16.msra.mxu0 %v132
      %158 = vmatprep.subr.bf16.mxu0 0
      %159 = vmatpush1.bf16.msra.mxu0 %v131
      %160 = vmatprep.subr.bf16.mxu0 0
      %161 = vmatpush1.bf16.msra.mxu0 %v130
      %162 = vmatprep.subr.bf16.mxu0 0
      %163 = vmatpush2.bf16.msra.mxu0 0
      %164 = vmatprep.subr.bf16.mxu0 0
      %165 = vmatpush2.bf16.msra.mxu0 0
      %166 = vmatprep.subr.bf16.mxu0 0
      %167 = vmatpush2.bf16.msra.mxu0 0
      %168 = vmatprep.subr.bf16.mxu0 0
      %169 = vmatpush2.bf16.msra.mxu0 0
      %170 = vmatprep.subr.bf16.mxu0 0
      %171 = vmatpush2.bf16.msra.mxu0 0
      %172 = vmatprep.subr.bf16.mxu0 0
      %173 = vmatpush2.bf16.msra.mxu0 0
      %174 = vmatprep.subr.bf16.mxu0 0
      %175 = vmatpush2.bf16.msra.mxu0 0
      %176 = vmatprep.subr.bf16.mxu0 0
      %177 = vmatpush2.bf16.msra.mxu0 0
      %178 = vmatprep.mubr.bf16.mxu0 0
      %179 = vmatmul.mubr.bf16.gmra.mxu0 %v96
      %v180 = vpop.f32.mrf.mxu0
      %v181 = vadd.f32 %v90, %v180
      %v182 = vpop.f32.mrf.mxu0
      %v183 = vpop.f32.mrf.mxu0
      %v184 = vadd.f32 %v90, %v183
      %v185 = vpop.f32.mrf.mxu0
      %186 = vdwg.mxu0
      %v187 = vmax.f32 %v181, 0.0
      %v188 = vmax.f32 %v184, 0.0
      %v189 = vpack.c.bf16 %v188, %v187
      %v191 = vunpack.c.l.b16 %v189
      %v192 = vunpack.c.h.b16 %v189
      %v193 = vpack.c.b16 %v191, %v191
      %v194 = vpack.c.b16 %v192, %v192
      %197 = vst [vmem:[#allocation2] sm:$0xf] %v193
      %198 = vst [vmem:[#allocation2 + $0x4] sm:$0xf] %v194
    $region37: #{tpu_custom_call.1} parent=1 // pred_fallthru
      _
    %v199 = vld [vmem:[#allocation2] sm:$0xf]
    %v200 = vld [vmem:[#allocation2 + $0x4] sm:$0xf]
    %v201 = vld [vmem:[#allocation8] sm:$0xf]
    %v202 = vld [vmem:[#allocation8 + $0x4] sm:$0xf]
    %v203 = vld [vmem:[#allocation8 + $0x8] sm:$0xf]
    %v204 = vld [vmem:[#allocation8 + $0xc] sm:$0xf]
    %v205 = vld [vmem:[#allocation8 + $0x10] sm:$0xf]
    %v206 = vld [vmem:[#allocation8 + $0x14] sm:$0xf]
    %v207 = vld [vmem:[#allocation8 + $0x18] sm:$0xf]
    %v208 = vld [vmem:[#allocation8 + $0x1c] sm:$0xf]
    %v209 = vld [vmem:[#allocation8 + $0x20] sm:$0xf]
    %v210 = vld [vmem:[#allocation8 + $0x24] sm:$0xf]
    %v211 = vld [vmem:[#allocation8 + $0x28] sm:$0xf]
    %v212 = vld [vmem:[#allocation8 + $0x2c] sm:$0xf]
    %v213 = vld [vmem:[#allocation8 + $0x30] sm:$0xf]
    %v214 = vld [vmem:[#allocation8 + $0x34] sm:$0xf]
    %v215 = vld [vmem:[#allocation8 + $0x38] sm:$0xf]
    %v216 = vld [vmem:[#allocation8 + $0x3c] sm:$0xf]
    %v217 = vld [vmem:[%s4] sm:$0x1]
    %v219 = vlaneseq
    %v220 = vshrl.u32 %v219, 7
    %v221 = vsub.s32 0, %v220
    %v222 = vrot.slane %v217, %v221
    %v226 = vunpack.c.l.b16 %v199
    %v227 = vunpack.c.l.b16 %v200
    %v228 = vpack.c.b16 %v227, %v226
    %v246 = vunpack.c.l.b16 %v201
    %v247 = vunpack.c.l.b16 %v202
    %v248 = vunpack.c.l.b16 %v203
    %v249 = vunpack.c.l.b16 %v204
    %v250 = vunpack.c.l.b16 %v205
    %v251 = vunpack.c.l.b16 %v206
    %v252 = vunpack.c.l.b16 %v207
    %v253 = vunpack.c.l.b16 %v208
    %v254 = vunpack.c.l.b16 %v209
    %v255 = vunpack.c.l.b16 %v210
    %v256 = vunpack.c.l.b16 %v211
    %v257 = vunpack.c.l.b16 %v212
    %v258 = vunpack.c.l.b16 %v213
    %v259 = vunpack.c.l.b16 %v214
    %v260 = vunpack.c.l.b16 %v215
    %v261 = vunpack.c.l.b16 %v216
    %v262 = vpack.c.b16 %v247, %v246
    %v263 = vpack.c.b16 %v249, %v248
    %v264 = vpack.c.b16 %v251, %v250
    %v265 = vpack.c.b16 %v253, %v252
    %v266 = vpack.c.b16 %v255, %v254
    %v267 = vpack.c.b16 %v257, %v256
    %v268 = vpack.c.b16 %v259, %v258
    %v269 = vpack.c.b16 %v261, %v260
    %278 = vmatprep.subr.bf16.mxu0 0
    %279 = vmatpush1.bf16.msra.mxu0 %v269
    %280 = vmatprep.subr.bf16.mxu0 0
    %281 = vmatpush1.bf16.msra.mxu0 %v268
    %282 = vmatprep.subr.bf16.mxu0 0
    %283 = vmatpush1.bf16.msra.mxu0 %v267
    %284 = vmatprep.subr.bf16.mxu0 0
    %285 = vmatpush1.bf16.msra.mxu0 %v266
    %286 = vmatprep.subr.bf16.mxu0 0
    %287 = vmatpush1.bf16.msra.mxu0 %v265
    %288 = vmatprep.subr.bf16.mxu0 0
    %289 = vmatpush1.bf16.msra.mxu0 %v264
    %290 = vmatprep.subr.bf16.mxu0 0
    %291 = vmatpush1.bf16.msra.mxu0 %v263
    %292 = vmatprep.subr.bf16.mxu0 0
    %293 = vmatpush1.bf16.msra.mxu0 %v262
    %294 = vmatprep.subr.bf16.mxu0 0
    %295 = vmatpush2.bf16.msra.mxu0 0
    %296 = vmatprep.subr.bf16.mxu0 0
    %297 = vmatpush2.bf16.msra.mxu0 0
    %298 = vmatprep.subr.bf16.mxu0 0
    %299 = vmatpush2.bf16.msra.mxu0 0
    %300 = vmatprep.subr.bf16.mxu0 0
    %301 = vmatpush2.bf16.msra.mxu0 0
    %302 = vmatprep.subr.bf16.mxu0 0
    %303 = vmatpush2.bf16.msra.mxu0 0
    %304 = vmatprep.subr.bf16.mxu0 0
    %305 = vmatpush2.bf16.msra.mxu0 0
    %306 = vmatprep.subr.bf16.mxu0 0
    %307 = vmatpush2.bf16.msra.mxu0 0
    %308 = vmatprep.subr.bf16.mxu0 0
    %309 = vmatpush2.bf16.msra.mxu0 0
    %310 = vmatprep.mubr.bf16.mxu0 0
    %311 = vmatmul.mubr.bf16.gmra.mxu0 %v228
    %v312 = vpop.f32.mrf.mxu0
    %v313 = vadd.f32 %v222, %v312
    %v314 = vpop.f32.mrf.mxu0
    %v315 = vpop.f32.mrf.mxu0
    %v316 = vadd.f32 %v222, %v315
    %v317 = vpop.f32.mrf.mxu0
    %318 = vdwg.mxu0
    %v319 = vmax.f32 %v313, 0.0
    %v320 = vmax.f32 %v316, 0.0
    %v321 = vand.u32 2147483647, %v313
    %v322 = vand.u32 2147483647, %v316
    %v323 = vsub.f32 0.0, %v321
    %v324 = vsub.f32 0.0, %v322
    %v325 = vmul.f32 %v323, 1.442695
    %v326 = vpow.pop %v325
    %v327 = vmul.f32 %v324, 1.442695
    %v328 = vpow.pop %v327
    %v329 = vadd.f32 %v326, 1.0
    %v330 = vlog2.pop %v329
    %v331 = vmul.f32 %v330, 0.6931472
    %v332 = vmul.f32 -0.5, %v326
    %v333 = vadd.f32 %v332, 1.0
    %v334 = vmul.f32 %v333, %v326
    %v335 = vand.u32 2147483647, %v326
    %vm336 = vcmp.lt.f32.partialorder %v335, 0.0004427343
    %v337 = vsel %vm336, %v334, %v331
    %v338 = vadd.f32 %v328, 1.0
    %v339 = vlog2.pop %v338
    %v340 = vmul.f32 %v339, 0.6931472
    %v341 = vmul.f32 -0.5, %v328
    %v342 = vadd.f32 %v341, 1.0
    %v343 = vmul.f32 %v342, %v328
    %v344 = vand.u32 2147483647, %v328
    %vm345 = vcmp.lt.f32.partialorder %v344, 0.0004427343
    %v346 = vsel %vm345, %v343, %v340
    %v347 = vadd.f32 %v319, %v337
    %v348 = vadd.f32 %v320, %v346
    %349 = vst [vmem:[#allocation9] sm:$0xff] %v347
    %350 = vst [vmem:[#allocation9 + $0x8] sm:$0xff] %v348
    // Predicated region
    $region38: #{tpu_custom_call.1} parent=1 // pred_check
      _
    $region39: #{tpu_custom_call.1} parent=1 // pred_check_branch
      %352 = sbr.rel (0) target = $region41
    $region40: #{tpu_custom_call.1} parent=1 // pred_region
      %s354 = ssub.s32 256, 256
      %355 = vsyncadd [#allocation5], %s354
      %s356 = sshll.u32 [#allocation9], 4
      %s357 = int_to_ptr.vmem [resolvable:$true] %s356
      %362 = dma.vmem_to_hbm [thread:$0]  %s357, 256, %s5, [#allocation5], 128, 128, 8
    $region41: #{tpu_custom_call.1} parent=1 // pred_fallthru
      _
    // Predicated region
    $region42: #{tpu_custom_call.1} parent=1 // pred_check
      _
    $region43: #{tpu_custom_call.1} parent=1 // pred_check_branch
      %364 = sbr.rel (0) target = $region45
    $region44: #{tpu_custom_call.1} parent=1 // pred_region
      %365 = dma.done [#allocation5], 256
    $region45: #{tpu_custom_call.1} parent=1 // pred_fallthru
      _
    %366 = vsyncpa [#allocation4], 1
    %367 = vsyncpa [#allocation7], 1
    %368 = vsyncpa [#allocation5], 1

// kernel: tpu_custom_call.1
$region0: #{tpu_custom_call.1}
  #allocation0 [shape = 'u32[]', space=smem, size = 0x4, offset = 0x4, fixed_abs, tag = 'smem constant byte address 0x4 - core index']
  #allocation1 [shape = 'u32[144,128]{1,0:T(1,128)}', space=vmem, size = 0x12000, scoped, tag = 'internal scratch']
  #allocation2 [shape = 'bf16[16,128]{1,0:T(8,128)(2,1)}', space=vmem, size = 0x1000, scoped, tag = 'scratch operand']
  %s0 = inlined_call_operand.hbm [shape: bf16[16,128], index: 0, kind: input, shape index: {}]
  %s1 = inlined_call_operand.hbm [shape: bf16[128,128], index: 1, kind: input, shape index: {}]
  %s2 = inlined_call_operand.vmem [shape: f32[1,128], index: 2, kind: input, shape index: {}]
  %s3 = inlined_call_operand.hbm [shape: bf16[128,128], index: 3, kind: input, shape index: {}]
  %s4 = inlined_call_operand.vmem [shape: f32[1,128], index: 4, kind: input, shape index: {}]
  %s5 = inlined_call_operand.hbm [shape: f32[16,128], index: 5, kind: output, shape index: {}]
  %s6 = sld [smem:[#allocation0]]
  $region46: #{tpu_custom_call.1} parent=0
    _
  %s8 = ssub.s32 1, %s6
  %s9 = scalar_select 0, %s8, %s6
  $region1: #{tpu_custom_call.1} parent=0
    #allocation3 [shape = 'u8[4096]{0}', space=vmem, size = 0x1000, scoped, tag = 'input window, operand 0, single buffered']
    #allocation4 [shape = 's32[1]{0}', space=sflag, size = 0x4, scoped, tag = 'scoped memory for tpu_custom_call.1']
    #allocation5 [shape = 's32[1]{0}', space=sflag, size = 0x4, scoped, tag = 'scoped memory for tpu_custom_call.1']
    #allocation6 [shape = 'u8[32768]{0}', space=vmem, size = 0x8000, scoped, tag = 'input window, operand 1, single buffered']
    #allocation7 [shape = 's32[1]{0}', space=sflag, size = 0x4, scoped, tag = 'scoped memory for tpu_custom_call.1']
    #allocation8 [shape = 'u8[32768]{0}', space=vmem, size = 0x8000, scoped, tag = 'input window, operand 3, single buffered']
    #allocation9 [shape = 'u8[8192]{0}', space=vmem, size = 0x2000, scoped, tag = 'output window, operand 0, single buffered']
    %10 = vsyncpa [#allocation4], 0
    %11 = vsyncpa [#allocation7], 0
    %12 = vsyncpa [#allocation5], 0
    // Predicated region
    $region2: #{tpu_custom_call.1} parent=1 // pred_check
      _
    $region3: #{tpu_custom_call.1} parent=1 // pred_check_branch
      %14 = sbr.rel (0) target = $region5
    $region4: #{tpu_custom_call.1} parent=1 // pred_region
      %s16 = ssub.s32 128, 128
      %17 = vsyncadd [#allocation4], %s16
      %s18 = sshll.u32 [#allocation3], 4
      %s19 = int_to_ptr.vmem [resolvable:$true] %s18
      %24 = dma.hbm_to_vmem [thread:$0]  %s0, 128, %s19, [#allocation4], 64, 64, 4
    $region5: #{tpu_custom_call.1} parent=1 // pred_fallthru
      _
    // Predicated region
    $region6: #{tpu_custom_call.1} parent=1 // pred_check
      _
    $region7: #{tpu_custom_call.1} parent=1 // pred_check_branch
      %26 = sbr.rel (0) target = $region9
    $region8: #{tpu_custom_call.1} parent=1 // pred_region
      %s28 = ssub.s32 1024, 1024
      %29 = vsyncadd [#allocation7], %s28
      %s30 = sshll.u32 [#allocation6], 4
      %s31 = int_to_ptr.vmem [resolvable:$true] %s30
      %36 = dma.hbm_to_vmem [thread:$0]  %s1, 1024, %s31, [#allocation7], 64, 64, 4
    $region9: #{tpu_custom_call.1} parent=1 // pred_fallthru
      _
    // Predicated region
    $region10: #{tpu_custom_call.1} parent=1 // pred_check
      _
    $region11: #{tpu_custom_call.1} parent=1 // pred_check_branch
      %38 = sbr.rel (0) target = $region13
    $region12: #{tpu_custom_call.1} parent=1 // pred_region
      _
    $region13: #{tpu_custom_call.1} parent=1 // pred_fallthru
      _
    // Predicated region
    $region14: #{tpu_custom_call.1} parent=1 // pred_check
      _
    $region15: #{tpu_custom_call.1} parent=1 // pred_check_branch
      %40 = sbr.rel (0) target = $region17
    $region16: #{tpu_custom_call.1} parent=1 // pred_region
      %s42 = ssub.s32 1024, 1024
      %43 = vsyncadd [#allocation7], %s42
      %s44 = sshll.u32 [#allocation8], 4
      %s45 = int_to_ptr.vmem [resolvable:$true] %s44
      %50 = dma.hbm_to_vmem [thread:$0]  %s3, 1024, %s45, [#allocation7], 64, 64, 4
    $region17: #{tpu_custom_call.1} parent=1 // pred_fallthru
      _
    // Predicated region
    $region18: #{tpu_custom_call.1} parent=1 // pred_check
      _
    $region19: #{tpu_custom_call.1} parent=1 // pred_check_branch
      %52 = sbr.rel (0) target = $region21
    $region20: #{tpu_custom_call.1} parent=1 // pred_region
      _
    $region21: #{tpu_custom_call.1} parent=1 // pred_fallthru
      _
    // Predicated region
    $region22: #{tpu_custom_call.1} parent=1 // pred_check
      _
    $region23: #{tpu_custom_call.1} parent=1 // pred_check_branch
      %54 = sbr.rel (0) target = $region25
    $region24: #{tpu_custom_call.1} parent=1 // pred_region
      %55 = dma.done [#allocation4], 128
    $region25: #{tpu_custom_call.1} parent=1 // pred_fallthru
      _
    // Predicated region
    $region26: #{tpu_custom_call.1} parent=1 // pred_check
      _
    $region27: #{tpu_custom_call.1} parent=1 // pred_check_branch
      %57 = sbr.rel (0) target = $region29
    $region28: #{tpu_custom_call.1} parent=1 // pred_region
      %58 = dma.done [#allocation7], 1024
    $region29: #{tpu_custom_call.1} parent=1 // pred_fallthru
      _
    // Predicated region
    $region30: #{tpu_custom_call.1} parent=1 // pred_check
      _
    $region31: #{tpu_custom_call.1} parent=1 // pred_check_branch
      %60 = sbr.rel (0) target = $region33
    $region32: #{tpu_custom_call.1} parent=1 // pred_region
      %61 = dma.done [#allocation7], 1024
    $region33: #{tpu_custom_call.1} parent=1 // pred_fallthru
      _
    %p63 = scmp.eq.s32.totalorder 0, 0
    // Predicated region
    $region34: #{tpu_custom_call.1} parent=1 // pred_check
      %p64 = pneg %p63
    $region35: #{tpu_custom_call.1} parent=1 // pred_check_branch
      %66 = sbr.rel (%p64) target = $region37
    $region36: #{tpu_custom_call.1} parent=1 // pred_region
      %v67 = vld [vmem:[#allocation3] sm:$0xf]
      %v68 = vld [vmem:[#allocation3 + $0x4] sm:$0xf]
      %v69 = vld [vmem:[#allocation6] sm:$0xf]
      %v70 = vld [vmem:[#allocation6 + $0x4] sm:$0xf]
      %v71 = vld [vmem:[#allocation6 + $0x8] sm:$0xf]
      %v72 = vld [vmem:[#allocation6 + $0xc] sm:$0xf]
      %v73 = vld [vmem:[#allocation6 + $0x10] sm:$0xf]
      %v74 = vld [vmem:[#allocation6 + $0x14] sm:$0xf]
      %v75 = vld [vmem:[#allocation6 + $0x18] sm:$0xf]
      %v76 = vld [vmem:[#allocation6 + $0x1c] sm:$0xf]
      %v77 = vld [vmem:[#allocation6 + $0x20] sm:$0xf]
      %v78 = vld [vmem:[#allocation6 + $0x24] sm:$0xf]
      %v79 = vld [vmem:[#allocation6 + $0x28] sm:$0xf]
      %v80 = vld [vmem:[#allocation6 + $0x2c] sm:$0xf]
      %v81 = vld [vmem:[#allocation6 + $0x30] sm:$0xf]
      %v82 = vld [vmem:[#allocation6 + $0x34] sm:$0xf]
      %v83 = vld [vmem:[#allocation6 + $0x38] sm:$0xf]
      %v84 = vld [vmem:[#allocation6 + $0x3c] sm:$0xf]
      %v85 = vld [vmem:[%s2] sm:$0x1]
      %v87 = vlaneseq
      %v88 = vshrl.u32 %v87, 7
      %v89 = vsub.s32 0, %v88
      %v90 = vrot.slane %v85, %v89
      %v94 = vunpack.c.l.b16 %v67
      %v95 = vunpack.c.l.b16 %v68
      %v96 = vpack.c.b16 %v95, %v94
      %v114 = vunpack.c.l.b16 %v69
      %v115 = vunpack.c.l.b16 %v70
      %v116 = vunpack.c.l.b16 %v71
      %v117 = vunpack.c.l.b16 %v72
      %v118 = vunpack.c.l.b16 %v73
      %v119 = vunpack.c.l.b16 %v74
      %v120 = vunpack.c.l.b16 %v75
      %v121 = vunpack.c.l.b16 %v76
      %v122 = vunpack.c.l.b16 %v77
      %v123 = vunpack.c.l.b16 %v78
      %v124 = vunpack.c.l.b16 %v79
      %v125 = vunpack.c.l.b16 %v80
      %v126 = vunpack.c.l.b16 %v81
      %v127 = vunpack.c.l.b16 %v82
      %v128 = vunpack.c.l.b16 %v83
      %v129 = vunpack.c.l.b16 %v84
      %v130 = vpack.c.b16 %v115, %v114
      %v131 = vpack.c.b16 %v117, %v116
      %v132 = vpack.c.b16 %v119, %v118
      %v133 = vpack.c.b16 %v121, %v120
      %v134 = vpack.c.b16 %v123, %v122
      %v135 = vpack.c.b16 %v125, %v124
      %v136 = vpack.c.b16 %v127, %v126
      %v137 = vpack.c.b16 %v129, %v128
      %146 = vmatprep.subr.bf16.mxu0 0
      %147 = vmatpush1.bf16.msra.mxu0 %v137
      %148 = vmatprep.subr.bf16.mxu0 0
      %149 = vmatpush1.bf16.msra.mxu0 %v136
      %150 = vmatprep.subr.bf16.mxu0 0
      %151 = vmatpush1.bf16.msra.mxu0 %v135
      %152 = vmatprep.subr.bf16.mxu0 0
      %153 = vmatpush1.bf16.msra.mxu0 %v134
      %154 = vmatprep.subr.bf16.mxu0 0
      %155 = vmatpush1.bf16.msra.mxu0 %v133
      %156 = vmatprep.subr.bf16.mxu0 0
      %157 = vmatpush1.bf16.msra.mxu0 %v132
      %158 = vmatprep.subr.bf16.mxu0 0
      %159 = vmatpush1.bf16.msra.mxu0 %v131
      %160 = vmatprep.subr.bf16.mxu0 0
      %161 = vmatpush1.bf16.msra.mxu0 %v130
      %162 = vmatprep.subr.bf16.mxu0 0
      %163 = vmatpush2.bf16.msra.mxu0 0
      %164 = vmatprep.subr.bf16.mxu0 0
      %165 = vmatpush2.bf16.msra.mxu0 0
      %166 = vmatprep.subr.bf16.mxu0 0
      %167 = vmatpush2.bf16.msra.mxu0 0
      %168 = vmatprep.subr.bf16.mxu0 0
      %169 = vmatpush2.bf16.msra.mxu0 0
      %170 = vmatprep.subr.bf16.mxu0 0
      %171 = vmatpush2.bf16.msra.mxu0 0
      %172 = vmatprep.subr.bf16.mxu0 0
      %173 = vmatpush2.bf16.msra.mxu0 0
      %174 = vmatprep.subr.bf16.mxu0 0
      %175 = vmatpush2.bf16.msra.mxu0 0
      %176 = vmatprep.subr.bf16.mxu0 0
      %177 = vmatpush2.bf16.msra.mxu0 0
      %178 = vmatprep.mubr.bf16.mxu0 0
      %179 = vmatmul.mubr.bf16.gmra.mxu0 %v96
      %v180 = vpop.f32.mrf.mxu0
      %v181 = vadd.f32 %v90, %v180
      %v182 = vpop.f32.mrf.mxu0
      %v183 = vpop.f32.mrf.mxu0
      %v184 = vadd.f32 %v90, %v183
      %v185 = vpop.f32.mrf.mxu0
      %186 = vdwg.mxu0
      %v187 = vmax.f32 %v181, 0.0
      %v188 = vmax.f32 %v184, 0.0
      %v189 = vpack.c.bf16 %v188, %v187
      %v191 = vunpack.c.l.b16 %v189
      %v192 = vunpack.c.h.b16 %v189
      %v193 = vpack.c.b16 %v191, %v191
      %v194 = vpack.c.b16 %v192, %v192
      %197 = vst [vmem:[#allocation2] sm:$0xf] %v193
      %198 = vst [vmem:[#allocation2 + $0x4] sm:$0xf] %v194
    $region37: #{tpu_custom_call.1} parent=1 // pred_fallthru
      _
    %v199 = vld [vmem:[#allocation2] sm:$0xf]
    %v200 = vld [vmem:[#allocation2 + $0x4] sm:$0xf]
    %v201 = vld [vmem:[#allocation8] sm:$0xf]
    %v202 = vld [vmem:[#allocation8 + $0x4] sm:$0xf]
    %v203 = vld [vmem:[#allocation8 + $0x8] sm:$0xf]
    %v204 = vld [vmem:[#allocation8 + $0xc] sm:$0xf]
    %v205 = vld [vmem:[#allocation8 + $0x10] sm:$0xf]
    %v206 = vld [vmem:[#allocation8 + $0x14] sm:$0xf]
    %v207 = vld [vmem:[#allocation8 + $0x18] sm:$0xf]
    %v208 = vld [vmem:[#allocation8 + $0x1c] sm:$0xf]
    %v209 = vld [vmem:[#allocation8 + $0x20] sm:$0xf]
    %v210 = vld [vmem:[#allocation8 + $0x24] sm:$0xf]
    %v211 = vld [vmem:[#allocation8 + $0x28] sm:$0xf]
    %v212 = vld [vmem:[#allocation8 + $0x2c] sm:$0xf]
    %v213 = vld [vmem:[#allocation8 + $0x30] sm:$0xf]
    %v214 = vld [vmem:[#allocation8 + $0x34] sm:$0xf]
    %v215 = vld [vmem:[#allocation8 + $0x38] sm:$0xf]
    %v216 = vld [vmem:[#allocation8 + $0x3c] sm:$0xf]
    %v217 = vld [vmem:[%s4] sm:$0x1]
    %v219 = vlaneseq
    %v220 = vshrl.u32 %v219, 7
    %v221 = vsub.s32 0, %v220
    %v222 = vrot.slane %v217, %v221
    %v226 = vunpack.c.l.b16 %v199
    %v227 = vunpack.c.l.b16 %v200
    %v228 = vpack.c.b16 %v227, %v226
    %v246 = vunpack.c.l.b16 %v201
    %v247 = vunpack.c.l.b16 %v202
    %v248 = vunpack.c.l.b16 %v203
    %v249 = vunpack.c.l.b16 %v204
    %v250 = vunpack.c.l.b16 %v205
    %v251 = vunpack.c.l.b16 %v206
    %v252 = vunpack.c.l.b16 %v207
    %v253 = vunpack.c.l.b16 %v208
    %v254 = vunpack.c.l.b16 %v209
    %v255 = vunpack.c.l.b16 %v210
    %v256 = vunpack.c.l.b16 %v211
    %v257 = vunpack.c.l.b16 %v212
    %v258 = vunpack.c.l.b16 %v213
    %v259 = vunpack.c.l.b16 %v214
    %v260 = vunpack.c.l.b16 %v215
    %v261 = vunpack.c.l.b16 %v216
    %v262 = vpack.c.b16 %v247, %v246
    %v263 = vpack.c.b16 %v249, %v248
    %v264 = vpack.c.b16 %v251, %v250
    %v265 = vpack.c.b16 %v253, %v252
    %v266 = vpack.c.b16 %v255, %v254
    %v267 = vpack.c.b16 %v257, %v256
    %v268 = vpack.c.b16 %v259, %v258
    %v269 = vpack.c.b16 %v261, %v260
    %278 = vmatprep.subr.bf16.mxu0 0
    %279 = vmatpush1.bf16.msra.mxu0 %v269
    %280 = vmatprep.subr.bf16.mxu0 0
    %281 = vmatpush1.bf16.msra.mxu0 %v268
    %282 = vmatprep.subr.bf16.mxu0 0
    %283 = vmatpush1.bf16.msra.mxu0 %v267
    %284 = vmatprep.subr.bf16.mxu0 0
    %285 = vmatpush1.bf16.msra.mxu0 %v266
    %286 = vmatprep.subr.bf16.mxu0 0
    %287 = vmatpush1.bf16.msra.mxu0 %v265
    %288 = vmatprep.subr.bf16.mxu0 0
    %289 = vmatpush1.bf16.msra.mxu0 %v264
    %290 = vmatprep.subr.bf16.mxu0 0
    %291 = vmatpush1.bf16.msra.mxu0 %v263
    %292 = vmatprep.subr.bf16.mxu0 0
    %293 = vmatpush1.bf16.msra.mxu0 %v262
    %294 = vmatprep.subr.bf16.mxu0 0
    %295 = vmatpush2.bf16.msra.mxu0 0
    %296 = vmatprep.subr.bf16.mxu0 0
    %297 = vmatpush2.bf16.msra.mxu0 0
    %298 = vmatprep.subr.bf16.mxu0 0
    %299 = vmatpush2.bf16.msra.mxu0 0
    %300 = vmatprep.subr.bf16.mxu0 0
    %301 = vmatpush2.bf16.msra.mxu0 0
    %302 = vmatprep.subr.bf16.mxu0 0
    %303 = vmatpush2.bf16.msra.mxu0 0
    %304 = vmatprep.subr.bf16.mxu0 0
    %305 = vmatpush2.bf16.msra.mxu0 0
    %306 = vmatprep.subr.bf16.mxu0 0
    %307 = vmatpush2.bf16.msra.mxu0 0
    %308 = vmatprep.subr.bf16.mxu0 0
    %309 = vmatpush2.bf16.msra.mxu0 0
    %310 = vmatprep.mubr.bf16.mxu0 0
    %311 = vmatmul.mubr.bf16.gmra.mxu0 %v228
    %v312 = vpop.f32.mrf.mxu0
    %v313 = vadd.f32 %v222, %v312
    %v314 = vpop.f32.mrf.mxu0
    %v315 = vpop.f32.mrf.mxu0
    %v316 = vadd.f32 %v222, %v315
    %v317 = vpop.f32.mrf.mxu0
    %318 = vdwg.mxu0
    %v319 = vmax.f32 %v313, 0.0
    %v320 = vmax.f32 %v316, 0.0
    %v321 = vand.u32 2147483647, %v313
    %v322 = vand.u32 2147483647, %v316
    %v323 = vsub.f32 0.0, %v321
    %v324 = vsub.f32 0.0, %v322
    %v325 = vmul.f32 %v323, 1.442695
    %v326 = vpow.pop %v325
    %v327 = vmul.f32 %v324, 1.442695
    %v328 = vpow.pop %v327
    %v329 = vadd.f32 %v326, 1.0
    %v330 = vlog2.pop %v329
    %v331 = vmul.f32 %v330, 0.6931472
    %v332 = vmul.f32 -0.5, %v326
    %v333 = vadd.f32 %v332, 1.0
    %v334 = vmul.f32 %v333, %v326
    %v335 = vand.u32 2147483647, %v326
    %vm336 = vcmp.lt.f32.partialorder %v335, 0.0004427343
    %v337 = vsel %vm336, %v334, %v331
    %v338 = vadd.f32 %v328, 1.0
    %v339 = vlog2.pop %v338
    %v340 = vmul.f32 %v339, 0.6931472
    %v341 = vmul.f32 -0.5, %v328
    %v342 = vadd.f32 %v341, 1.0
    %v343 = vmul.f32 %v342, %v328
    %v344 = vand.u32 2147483647, %v328
    %vm345 = vcmp.lt.f32.partialorder %v344, 0.0004427343
    %v346 = vsel %vm345, %v343, %v340
    %v347 = vadd.f32 %v319, %v337
    %v348 = vadd.f32 %v320, %v346
    %349 = vst [vmem:[#allocation9] sm:$0xff] %v347
    %350 = vst [vmem:[#allocation9 + $0x8] sm:$0xff] %v348
    // Predicated region
    $region38: #{tpu_custom_call.1} parent=1 // pred_check
      _
    $region39: #{tpu_custom_call.1} parent=1 // pred_check_branch
      %352 = sbr.rel (0) target = $region41
    $region40: #{tpu_custom_call.1} parent=1 // pred_region
      %s354 = ssub.s32 256, 256
      %355 = vsyncadd [#allocation5], %s354
      %s356 = sshll.u32 [#allocation9], 4
      %s357 = int_to_ptr.vmem [resolvable:$true] %s356
      %362 = dma.vmem_to_hbm [thread:$0]  %s357, 256, %s5, [#allocation5], 128, 128, 8
    $region41: #{tpu_custom_call.1} parent=1 // pred_fallthru
      _
    // Predicated region
    $region42: #{tpu_custom_call.1} parent=1 // pred_check
      _
    $region43: #{tpu_custom_call.1} parent=1 // pred_check_branch
      %364 = sbr.rel (0) target = $region45
    $region44: #{tpu_custom_call.1} parent=1 // pred_region
      %365 = dma.done [#allocation5], 256
    $region45: #{tpu_custom_call.1} parent=1 // pred_fallthru
      _
    %366 = vsyncpa [#allocation4], 1
    %367 = vsyncpa [#allocation7], 1
    %368 = vsyncpa [#allocation5], 1

</llo_original>
